<compile_context>
chip_gen: v7x
topology: tpu7x:2x2x1
jax: 0.10.0
libtpu: 0.0.40
codegen_flags: <defaults>
</compile_context>

<pallas_src>
import functools
import numpy as np

import jax
import jax.numpy as jnp
from jax.experimental import pallas as pl
from jax.experimental.pallas import tpu as pltpu

_BF16 = jnp.bfloat16


def _layernorm(v, g, b, eps=1e-5):
    mu = jnp.mean(v, axis=-1, keepdims=True)
    var = jnp.mean((v - mu) ** 2, axis=-1, keepdims=True)
    return (v - mu) * jax.lax.rsqrt(var + eps) * g + b


# ----------------- kernel 1: LN1 + fused QKV projection -----------------
def qkv_kernel(x_ref, ln1_g, ln1_b, w_attn, b_attn, q_ref, k_ref, v_ref, *, n_head):
    x = x_ref[0].astype(jnp.float32)                       # (tt, C)
    C = x.shape[-1]
    hd = C // n_head
    h = _layernorm(x, ln1_g[...], ln1_b[...])
    qkv = jnp.dot(h.astype(_BF16), w_attn[...],
                  preferred_element_type=jnp.float32) + b_attn[...]
    scale = 1.0 / float(hd) ** 0.5                         # fold scale into q
    q_ref[0] = (qkv[:, :C] * scale).astype(q_ref.dtype)
    k_ref[0] = qkv[:, C:2 * C].astype(k_ref.dtype)
    v_ref[0] = qkv[:, 2 * C:].astype(v_ref.dtype)


# ----- kernel 2: attention (batched heads) + residual + LN2 + MLP -----
def attn_mlp_kernel(x_ref, q_ref, k_ref, v_ref,
                    w_cp, b_cp, ln2_g, ln2_b, w_fc, b_fc, w_mp, b_mp,
                    out_ref, *, n_head):
    tq = x_ref.shape[1]
    T = k_ref.shape[1]
    C = x_ref.shape[-1]
    hd = C // n_head
    q_start = pl.program_id(1) * tq

    x = x_ref[0].astype(jnp.float32)                       # (tq, C)
    q2 = q_ref[0]                                          # (tq, C) bf16, pre-scaled
    k2 = k_ref[0]                                          # (T,  C) bf16
    v2 = v_ref[0]                                          # (T,  C) bf16

    # Batch heads along a leading axis -> one batched MXU op per stage
    qh = jnp.stack([q2[:, i * hd:(i + 1) * hd] for i in range(n_head)], axis=0)  # (H,tq,hd)
    kh = jnp.stack([k2[:, i * hd:(i + 1) * hd] for i in range(n_head)], axis=0)  # (H,T,hd)
    vh = jnp.stack([v2[:, i * hd:(i + 1) * hd] for i in range(n_head)], axis=0)  # (H,T,hd)

    s = jnp.einsum('htd,hsd->hts', qh, kh,
                   preferred_element_type=jnp.float32)     # (H, tq, T)

    row = q_start + jax.lax.broadcasted_iota(jnp.int32, (tq, T), 0)
    col = jax.lax.broadcasted_iota(jnp.int32, (tq, T), 1)
    s = jnp.where((row >= col)[None, :, :], s, -jnp.inf)

    m = jnp.max(s, axis=-1, keepdims=True)                 # softmax in f32
    p = jnp.exp(s - m)
    l = jnp.sum(p, axis=-1, keepdims=True)
    p = p * pl.reciprocal(l, approx=True)                  # EUP slot, not VALU

    y = jnp.einsum('hts,hsd->htd', p.astype(_BF16), vh,
                   preferred_element_type=jnp.float32)     # (H, tq, hd)
    y2 = jnp.concatenate([y[i] for i in range(n_head)], axis=-1)   # (tq, C)

    attn = jnp.dot(y2.astype(_BF16), w_cp[...],
                   preferred_element_type=jnp.float32) + b_cp[...]
    x1 = x + attn                                          # residual 1

    h2 = _layernorm(x1, ln2_g[...], ln2_b[...])
    u = jnp.dot(h2.astype(_BF16), w_fc[...],
                preferred_element_type=jnp.float32) + b_fc[...]
    u = 0.5 * u * (1.0 + jax.lax.erf(u * 0.7071067811865476))   # exact GELU
    mlp = jnp.dot(u.astype(_BF16), w_mp[...],
                  preferred_element_type=jnp.float32) + b_mp[...]
    out_ref[0] = (x1 + mlp).astype(out_ref.dtype)          # residual 2


def decoder_block(x, params, n_head, *, seq_tile=256):
    B, T, C = x.shape
    assert C % n_head == 0

    # MXU operands in bf16 (cast once, outside the grid); LN params / biases f32.
    w_attn = params["w_attn"].astype(_BF16)
    w_cp = params["w_cp"].astype(_BF16)
    w_fc = params["w_fc"].astype(_BF16)
    w_mp = params["w_mp"].astype(_BF16)

    tt = seq_tile if (T % seq_tile == 0) else T            # sequence tile
    cparams = pltpu.CompilerParams(
        dimension_semantics=("parallel", "parallel"),
        vmem_limit_bytes=64 * 1024 * 1024)

    tile_spec = pl.BlockSpec((1, tt, C), lambda b, t: (b, t, 0))
    full_spec = pl.BlockSpec((1, T, C), lambda b, t: (b, 0, 0))
    qkv_out = jax.ShapeDtypeStruct((B, T, C), _BF16)

    # ---- pass 1: LN1 + QKV projection ----
    q, k, v = pl.pallas_call(
        functools.partial(qkv_kernel, n_head=n_head),
        out_shape=(qkv_out, qkv_out, qkv_out),
        grid_spec=pltpu.PrefetchScalarGridSpec(
            num_scalar_prefetch=0,
            grid=(B, T // tt),
            in_specs=[
                tile_spec,                                       # x tile
                pl.BlockSpec((1, C), lambda b, t: (0, 0)),       # ln1_g
                pl.BlockSpec((1, C), lambda b, t: (0, 0)),       # ln1_b
                pl.BlockSpec((C, 3 * C), lambda b, t: (0, 0)),   # w_attn
                pl.BlockSpec((1, 3 * C), lambda b, t: (0, 0)),   # b_attn
            ],
            out_specs=(tile_spec, tile_spec, tile_spec),
        ),
        compiler_params=cparams,
    )(x, params["ln1_g"], params["ln1_b"], w_attn, params["b_attn"])

    # ---- pass 2: attention + c_proj + residual + LN2 + MLP + residual ----
    # TODO(synk): for very large C, stream w_fc/w_mp over a K grid axis instead
    # of loading the full weights per step.
    out = pl.pallas_call(
        functools.partial(attn_mlp_kernel, n_head=n_head),
        out_shape=jax.ShapeDtypeStruct((B, T, C), x.dtype),
        grid_spec=pltpu.PrefetchScalarGridSpec(
            num_scalar_prefetch=0,
            grid=(B, T // tt),
            in_specs=[
                tile_spec,                                       # x tile (residual)
                tile_spec,                                       # q tile
                full_spec,                                       # k (all keys)
                full_spec,                                       # v (all values)
                pl.BlockSpec((C, C), lambda b, t: (0, 0)),       # w_cp
                pl.BlockSpec((1, C), lambda b, t: (0, 0)),       # b_cp
                pl.BlockSpec((1, C), lambda b, t: (0, 0)),       # ln2_g
                pl.BlockSpec((1, C), lambda b, t: (0, 0)),       # ln2_b
                pl.BlockSpec((C, 4 * C), lambda b, t: (0, 0)),   # w_fc
                pl.BlockSpec((1, 4 * C), lambda b, t: (0, 0)),   # b_fc
                pl.BlockSpec((4 * C, C), lambda b, t: (0, 0)),   # w_mp
                pl.BlockSpec((1, C), lambda b, t: (0, 0)),       # b_mp
            ],
            out_specs=tile_spec,
        ),
        compiler_params=cparams,
    )(x, q, k, v, w_cp, params["b_cp"], params["ln2_g"], params["ln2_b"],
      w_fc, params["b_fc"], w_mp, params["b_mp"])
    return out


def reference(x, p, n_head):
    """Pure-JAX f32 reference mirroring the PyTorch forward (eval mode)."""
    B, T, C = x.shape
    hd = C // n_head

    def ln(v, g, b):
        mu = jnp.mean(v, -1, keepdims=True)
        var = jnp.mean((v - mu) ** 2, -1, keepdims=True)
        return (v - mu) / jnp.sqrt(var + 1e-5) * g + b

    h = ln(x, p["ln1_g"], p["ln1_b"])
    qkv = h @ p["w_attn"] + p["b_attn"]
    q, k, v = jnp.split(qkv, 3, axis=-1)
    q = q.reshape(B, T, n_head, hd).transpose(0, 2, 1, 3)
    k = k.reshape(B, T, n_head, hd).transpose(0, 2, 1, 3)
    v = v.reshape(B, T, n_head, hd).transpose(0, 2, 1, 3)
    s = (q @ jnp.swapaxes(k, -1, -2)) / jnp.sqrt(float(hd))
    mask = jnp.tril(jnp.ones((T, T), bool))
    s = jnp.where(mask, s, -jnp.inf)
    a = jax.nn.softmax(s, axis=-1)
    y = (a @ v).transpose(0, 2, 1, 3).reshape(B, T, C)
    y = y @ p["w_cp"] + p["b_cp"]
    x1 = x + y
    h2 = ln(x1, p["ln2_g"], p["ln2_b"])
    u = jax.nn.gelu(h2 @ p["w_fc"] + p["b_fc"], approximate=False)
    m = u @ p["w_mp"] + p["b_mp"]
    return x1 + m


if __name__ == "__main__":
    B, T, C, n_head = 2, 128, 128, 4

    key = jax.random.PRNGKey(0)
    ks = jax.random.split(key, 14)

    def nrm(k, shape, s=0.02):
        return (s * jax.random.normal(k, shape)).astype(jnp.float32)

    params = dict(
        ln1_g=(jnp.ones((1, C), jnp.float32) + nrm(ks[0], (1, C), 0.01)),
        ln1_b=nrm(ks[1], (1, C), 0.01),
        w_attn=nrm(ks[2], (C, 3 * C)),
        b_attn=nrm(ks[3], (1, 3 * C), 0.01),
        w_cp=nrm(ks[4], (C, C)),
        b_cp=nrm(ks[5], (1, C), 0.01),
        ln2_g=(jnp.ones((1, C), jnp.float32) + nrm(ks[6], (1, C), 0.01)),
        ln2_b=nrm(ks[7], (1, C), 0.01),
        w_fc=nrm(ks[8], (C, 4 * C)),
        b_fc=nrm(ks[9], (1, 4 * C), 0.01),
        w_mp=nrm(ks[10], (4 * C, C)),
        b_mp=nrm(ks[11], (1, C), 0.01),
    )
    x = jax.random.normal(ks[12], (B, T, C), jnp.float32)

    out = jax.block_until_ready(decoder_block(x, params, n_head))
    ref = reference(x, params, n_head)
    # bf16 matmul operands (f32 accumulation) -> slightly looser tolerance than f32
    np.testing.assert_allclose(np.asarray(out), np.asarray(ref), atol=2e-2, rtol=2e-2)
    print("KERNEL_OK")
</pallas_src>

<mosaic_0001>
module attributes {stable_mosaic.version = 11 : i64} {
  func.func @qkv_kernel(%arg0: i32, %arg1: i32, %arg2: memref<1x128x128xf32, #tpu.memory_space<vmem>>, %arg3: memref<1x128xf32, #tpu.memory_space<vmem>>, %arg4: memref<1x128xf32, #tpu.memory_space<vmem>>, %arg5: memref<128x384xbf16, #tpu.memory_space<vmem>>, %arg6: memref<1x384xf32, #tpu.memory_space<vmem>>, %arg7: memref<1x128x128xbf16, #tpu.memory_space<vmem>>, %arg8: memref<1x128x128xbf16, #tpu.memory_space<vmem>>, %arg9: memref<1x128x128xbf16, #tpu.memory_space<vmem>>) attributes {dimension_semantics = [#tpu.dimension_semantics<parallel>, #tpu.dimension_semantics<parallel>], iteration_bounds = array<i64: 2, 1>, scalar_prefetch = 0 : i64, scratch_operands = 0 : i64, tpu.core_type = #tpu.core_type<tc>, window_params = [{transform_indices = @transform_0, window_bounds = array<i64: 1, 128, 128>}, {pipeline_mode = #tpu.pipeline_mode<synchronous>, transform_indices = @transform_1, window_bounds = array<i64: 1, 128>}, {pipeline_mode = #tpu.pipeline_mode<synchronous>, transform_indices = @transform_2, window_bounds = array<i64: 1, 128>}, {pipeline_mode = #tpu.pipeline_mode<synchronous>, transform_indices = @transform_3, window_bounds = array<i64: 128, 384>}, {pipeline_mode = #tpu.pipeline_mode<synchronous>, transform_indices = @transform_4, window_bounds = array<i64: 1, 384>}, {transform_indices = @transform_5, window_bounds = array<i64: 1, 128, 128>}, {transform_indices = @transform_6, window_bounds = array<i64: 1, 128, 128>}, {transform_indices = @transform_7, window_bounds = array<i64: 1, 128, 128>}]} {
    %c0 = arith.constant 0 : index
    %c0_0 = arith.constant 0 : index
    %c0_1 = arith.constant 0 : index
    %0 = vector.load %arg2[%c0, %c0_0, %c0_1] : memref<1x128x128xf32, #tpu.memory_space<vmem>>, vector<1x128x128xf32>
    %1 = vector.shape_cast %0 : vector<1x128x128xf32> to vector<128x128xf32>
    %c0_2 = arith.constant 0 : index
    %c0_3 = arith.constant 0 : index
    %2 = vector.load %arg3[%c0_2, %c0_3] : memref<1x128xf32, #tpu.memory_space<vmem>>, vector<1x128xf32>
    %c0_4 = arith.constant 0 : index
    %c0_5 = arith.constant 0 : index
    %3 = vector.load %arg4[%c0_4, %c0_5] : memref<1x128xf32, #tpu.memory_space<vmem>>, vector<1x128xf32>
    %cst = arith.constant dense<0.000000e+00> : vector<128xf32>
    %4 = vector.multi_reduction <add>, %1, %cst [1] : vector<128x128xf32> to vector<128xf32>
    %5 = vector.shape_cast %4 : vector<128xf32> to vector<128x1xf32>
    %cst_6 = arith.constant 1.280000e+02 : f32
    %6 = vector.broadcast %cst_6 : f32 to vector<128x1xf32>
    %7 = arith.divf %5, %6 : vector<128x1xf32>
    %8 = vector.broadcast %7 : vector<128x1xf32> to vector<128x128xf32>
    %9 = arith.subf %1, %8 : vector<128x128xf32>
    %10 = arith.mulf %9, %9 : vector<128x128xf32>
    %cst_7 = arith.constant dense<0.000000e+00> : vector<128xf32>
    %11 = vector.multi_reduction <add>, %10, %cst_7 [1] : vector<128x128xf32> to vector<128xf32>
    %12 = vector.shape_cast %11 : vector<128xf32> to vector<128x1xf32>
    %cst_8 = arith.constant 1.280000e+02 : f32
    %13 = vector.broadcast %cst_8 : f32 to vector<128x1xf32>
    %14 = arith.divf %12, %13 : vector<128x1xf32>
    %15 = vector.broadcast %7 : vector<128x1xf32> to vector<128x128xf32>
    %16 = arith.subf %1, %15 : vector<128x128xf32>
    %cst_9 = arith.constant 9.99999974E-6 : f32
    %17 = vector.broadcast %cst_9 : f32 to vector<128x1xf32>
    %18 = arith.addf %14, %17 : vector<128x1xf32>
    %19 = math.rsqrt %18 : vector<128x1xf32>
    %20 = vector.broadcast %19 : vector<128x1xf32> to vector<128x128xf32>
    %21 = arith.mulf %16, %20 : vector<128x128xf32>
    %22 = vector.broadcast %2 : vector<1x128xf32> to vector<128x128xf32>
    %23 = arith.mulf %21, %22 : vector<128x128xf32>
    %24 = vector.broadcast %3 : vector<1x128xf32> to vector<128x128xf32>
    %25 = arith.addf %23, %24 : vector<128x128xf32>
    %26 = arith.truncf %25 : vector<128x128xf32> to vector<128x128xbf16>
    %c0_10 = arith.constant 0 : index
    %c0_11 = arith.constant 0 : index
    %27 = vector.load %arg5[%c0_10, %c0_11] : memref<128x384xbf16, #tpu.memory_space<vmem>>, vector<128x384xbf16>
    %cst_12 = arith.constant dense<0.000000e+00> : vector<128x384xf32>
    %28 = tpu.matmul %26, %27, %cst_12 {dimension_numbers = #tpu.dot_dimension_numbers<[1], [0], [0], [1], [0, 0, 1, 1], [], []>} : vector<128x128xbf16>, vector<128x384xbf16>, vector<128x384xf32> -> vector<128x384xf32>
    %c0_13 = arith.constant 0 : index
    %c0_14 = arith.constant 0 : index
    %29 = vector.load %arg6[%c0_13, %c0_14] : memref<1x384xf32, #tpu.memory_space<vmem>>, vector<1x384xf32>
    %30 = vector.broadcast %29 : vector<1x384xf32> to vector<128x384xf32>
    %31 = arith.addf %28, %30 : vector<128x384xf32>
    %32 = vector.extract_strided_slice %31 {offsets = [0, 0], sizes = [128, 128], strides = [1, 1]} : vector<128x384xf32> to vector<128x128xf32>
    %cst_15 = arith.constant 0.176776692 : f32
    %33 = vector.broadcast %cst_15 : f32 to vector<128x128xf32>
    %34 = arith.mulf %32, %33 : vector<128x128xf32>
    %35 = arith.truncf %34 : vector<128x128xf32> to vector<128x128xbf16>
    %c0_16 = arith.constant 0 : index
    %c0_17 = arith.constant 0 : index
    %c0_18 = arith.constant 0 : index
    %36 = vector.load %arg7[%c0_16, %c0_17, %c0_18] : memref<1x128x128xbf16, #tpu.memory_space<vmem>>, vector<1x128x128xbf16>
    %37 = vector.shape_cast %36 : vector<1x128x128xbf16> to vector<128x128xbf16>
    %38 = vector.shape_cast %35 : vector<128x128xbf16> to vector<1x128x128xbf16>
    tpu.vector_store %arg7[%c0_16, %c0_17, %c0_18], %38 {strides = array<i32>} : memref<1x128x128xbf16, #tpu.memory_space<vmem>>, vector<1x128x128xbf16>,
    %39 = vector.extract_strided_slice %31 {offsets = [0, 128], sizes = [128, 128], strides = [1, 1]} : vector<128x384xf32> to vector<128x128xf32>
    %40 = arith.truncf %39 : vector<128x128xf32> to vector<128x128xbf16>
    %c0_19 = arith.constant 0 : index
    %c0_20 = arith.constant 0 : index
    %c0_21 = arith.constant 0 : index
    %41 = vector.load %arg8[%c0_19, %c0_20, %c0_21] : memref<1x128x128xbf16, #tpu.memory_space<vmem>>, vector<1x128x128xbf16>
    %42 = vector.shape_cast %41 : vector<1x128x128xbf16> to vector<128x128xbf16>
    %43 = vector.shape_cast %40 : vector<128x128xbf16> to vector<1x128x128xbf16>
    tpu.vector_store %arg8[%c0_19, %c0_20, %c0_21], %43 {strides = array<i32>} : memref<1x128x128xbf16, #tpu.memory_space<vmem>>, vector<1x128x128xbf16>,
    %44 = vector.extract_strided_slice %31 {offsets = [0, 256], sizes = [128, 128], strides = [1, 1]} : vector<128x384xf32> to vector<128x128xf32>
    %45 = arith.truncf %44 : vector<128x128xf32> to vector<128x128xbf16>
    %c0_22 = arith.constant 0 : index
    %c0_23 = arith.constant 0 : index
    %c0_24 = arith.constant 0 : index
    %46 = vector.load %arg9[%c0_22, %c0_23, %c0_24] : memref<1x128x128xbf16, #tpu.memory_space<vmem>>, vector<1x128x128xbf16>
    %47 = vector.shape_cast %46 : vector<1x128x128xbf16> to vector<128x128xbf16>
    %48 = vector.shape_cast %45 : vector<128x128xbf16> to vector<1x128x128xbf16>
    tpu.vector_store %arg9[%c0_22, %c0_23, %c0_24], %48 {strides = array<i32>} : memref<1x128x128xbf16, #tpu.memory_space<vmem>>, vector<1x128x128xbf16>,
    return
  }
  func.func @transform_0(%arg0: i32, %arg1: i32) -> (i32, i32, i32) {
    %c0_i32 = arith.constant 0 : i32
    %c0_i32_0 = arith.constant 0 : i32
    return %arg0, %arg1, %c0_i32 : i32, i32, i32
  }
  func.func @transform_1(%arg0: i32, %arg1: i32) -> (i32, i32) {
    %c0_i32 = arith.constant 0 : i32
    %c0_i32_0 = arith.constant 0 : i32
    %c0_i32_1 = arith.constant 0 : i32
    return %c0_i32, %c0_i32_0 : i32, i32
  }
  func.func @transform_2(%arg0: i32, %arg1: i32) -> (i32, i32) {
    %c0_i32 = arith.constant 0 : i32
    %c0_i32_0 = arith.constant 0 : i32
    %c0_i32_1 = arith.constant 0 : i32
    return %c0_i32, %c0_i32_0 : i32, i32
  }
  func.func @transform_3(%arg0: i32, %arg1: i32) -> (i32, i32) {
    %c0_i32 = arith.constant 0 : i32
    %c0_i32_0 = arith.constant 0 : i32
    %c0_i32_1 = arith.constant 0 : i32
    return %c0_i32, %c0_i32_0 : i32, i32
  }
  func.func @transform_4(%arg0: i32, %arg1: i32) -> (i32, i32) {
    %c0_i32 = arith.constant 0 : i32
    %c0_i32_0 = arith.constant 0 : i32
    %c0_i32_1 = arith.constant 0 : i32
    return %c0_i32, %c0_i32_0 : i32, i32
  }
  func.func @transform_5(%arg0: i32, %arg1: i32) -> (i32, i32, i32) {
    %c0_i32 = arith.constant 0 : i32
    %c0_i32_0 = arith.constant 0 : i32
    return %arg0, %arg1, %c0_i32 : i32, i32, i32
  }
  func.func @transform_6(%arg0: i32, %arg1: i32) -> (i32, i32, i32) {
    %c0_i32 = arith.constant 0 : i32
    %c0_i32_0 = arith.constant 0 : i32
    return %arg0, %arg1, %c0_i32 : i32, i32, i32
  }
  func.func @transform_7(%arg0: i32, %arg1: i32) -> (i32, i32, i32) {
    %c0_i32 = arith.constant 0 : i32
    %c0_i32_0 = arith.constant 0 : i32
    return %arg0, %arg1, %c0_i32 : i32, i32, i32
  }
}

</mosaic_0001>

<llo_original>
// kernel: tpu_custom_call.1
$region0: #{tpu_custom_call.1}
  #allocation0 [shape = 'u32[]', space=smem, size = 0x4, offset = 0x4, fixed_abs, tag = 'smem constant byte address 0x4 - core index']
  #allocation1 [shape = 'u32[144,128]{1,0:T(1,128)}', space=vmem, size = 0x12000, scoped, tag = 'internal scratch']
  %s0 = inlined_call_operand.hbm [shape: f32[2,128,128], index: 0, kind: input, shape index: {}]
  %s1 = inlined_call_operand.hbm [shape: f32[1,128], index: 1, kind: input, shape index: {}]
  %s2 = inlined_call_operand.hbm [shape: f32[1,128], index: 2, kind: input, shape index: {}]
  %s3 = inlined_call_operand.hbm [shape: bf16[128,384], index: 3, kind: input, shape index: {}]
  %s4 = inlined_call_operand.hbm [shape: f32[1,384], index: 4, kind: input, shape index: {}]
  %s5 = inlined_call_operand.hbm [shape: bf16[2,128,128], index: 5, kind: output, shape index: {0}]
  %s6 = inlined_call_operand.hbm [shape: bf16[2,128,128], index: 6, kind: output, shape index: {1}]
  %s7 = inlined_call_operand.hbm [shape: bf16[2,128,128], index: 7, kind: output, shape index: {2}]
  %8 = xla_tuple %s5, %s6, %s7
  %s9 = sld [smem:[#allocation0]]
  $region89: #{tpu_custom_call.1} parent=0
    _
  %s11 = ssub.s32 1, %s9
  %s12 = scalar_select 0, %s11, %s9
  $region1: #{tpu_custom_call.1} parent=0
    #allocation2 [shape = 'u8[131072]{0}', space=vmem, size = 0x20000, scoped, tag = 'input window, operand 0']
    #allocation3 [shape = 's32[2]{0}', space=sflag, size = 0x8, scoped, tag = 'scoped memory for tpu_custom_call.1']
    #allocation4 [shape = 's32[2]{0}', space=sflag, size = 0x8, scoped, tag = 'scoped memory for tpu_custom_call.1']
    #allocation5 [shape = 'u8[512]{0}', space=vmem, size = 0x400, scoped, tag = 'input window, operand 1, single buffered']
    #allocation6 [shape = 's32[1]{0}', space=sflag, size = 0x4, scoped, tag = 'scoped memory for tpu_custom_call.1']
    #allocation7 [shape = 'u8[512]{0}', space=vmem, size = 0x400, scoped, tag = 'input window, operand 2, single buffered']
    #allocation8 [shape = 'u8[98304]{0}', space=vmem, size = 0x18000, scoped, tag = 'input window, operand 3, single buffered']
    #allocation9 [shape = 's32[1]{0}', space=sflag, size = 0x4, scoped, tag = 'scoped memory for tpu_custom_call.1']
    #allocation10 [shape = 'u8[1536]{0}', space=vmem, size = 0x800, scoped, tag = 'input window, operand 4, single buffered']
    #allocation11 [shape = 'u8[65536]{0}', space=vmem, size = 0x10000, scoped, tag = 'output window, operand 0']
    #allocation12 [shape = 'u8[65536]{0}', space=vmem, size = 0x10000, scoped, tag = 'output window, operand 1']
    #allocation13 [shape = 's32[2]{0}', space=sflag, size = 0x8, scoped, tag = 'scoped memory for tpu_custom_call.1']
    #allocation14 [shape = 'u8[65536]{0}', space=vmem, size = 0x10000, scoped, tag = 'output window, operand 2']
    %13 = vsyncpa [#allocation3], 0
    %s14 = scalar_lea.sflag [#allocation3], 1
    %15 = vsyncpa %s14, 0
    %16 = vsyncpa [#allocation6], 0
    %17 = vsyncpa [#allocation9], 0
    %18 = vsyncpa [#allocation4], 0
    %s19 = scalar_lea.sflag [#allocation4], 1
    %20 = vsyncpa %s19, 0
    %21 = vsyncpa [#allocation13], 0
    %s22 = scalar_lea.sflag [#allocation13], 1
    %23 = vsyncpa %s22, 0
    loop: start=0, step=1, limit=4
    $region2: #{tpu_custom_call.1} parent=1 // loop_pre_header
      _
    $region3: #{tpu_custom_call.1} parent=1 // loop_header
      %s25 = sphi 0, %s29
      %p26 = scmp.ge.s32.totalorder %s25, 4
      %s32 = sphi 0, %s44
      %s33 = sphi 0, %s40
      %s34 = sphi 0, %s32
      %s35 = sphi 0, %s33
      %s36 = sphi 0, %s34
      %s37 = sphi 0, %s35
      %s49 = sphi 0, %s51
      %s52 = sphi 0, %s49
      %s53 = sphi 0, %s52
      %s69 = sphi 0, %s53
      %s73 = sphi 0, %s73
      %s75 = sphi 0, %s73
      %s76 = sphi 0, %s75
      %s90 = sphi 0, %s76
      %s94 = sphi 0, %s94
      %s96 = sphi 0, %s94
      %s97 = sphi 0, %s96
      %s111 = sphi 0, %s97
      %s115 = sphi 0, %s115
      %s117 = sphi 0, %s115
      %s118 = sphi 0, %s117
      %s132 = sphi 0, %s118
      %s136 = sphi 0, %s136
      %s138 = sphi 0, %s136
      %s139 = sphi 0, %s138
      %s153 = sphi 0, %s139
      %s161 = sphi 0, %s163
      %s164 = sphi 0, %s161
      %s165 = sphi 0, %s164
      %s181 = sphi 0, %s165
      %s189 = sphi 0, %s191
      %s192 = sphi 0, %s189
      %s193 = sphi 0, %s192
      %s209 = sphi 0, %s193
      %s217 = sphi 0, %s219
      %s220 = sphi 0, %s217
      %s221 = sphi 0, %s220
      %s237 = sphi 0, %s221
    $region4: #{tpu_custom_call.1} parent=1 // loop_header_branch
      %28 = sbr.rel (%p26) target = $region8
    $region5: #{tpu_custom_call.1} parent=1 // loop_body
      %s30 = ssub.s32 %s25, 1
      %s31 = ssub.s32 %s25, 2
      %s38 = sadd.s32 1, %s33
      %p39 = scmp.ge.s32.totalorder %s38, 1
      %s40 = scalar_select %p39, 0, %s38
      %s41 = sadd.s32 1, %s32
      %s42 = scalar_select %p39, %s41, %s32
      %p43 = scmp.ge.s32.totalorder %s42, 2
      %s44 = scalar_select %p43, 0, %s42
      %s45 = ssub.s32 %s32, %s44
      %s46 = ssub.s32 %s33, %s40
      %s47 = sor.u32 %s45, %s46
      %p48 = scmp.eq.s32.totalorder %s47, 0
      %s50 = sadd.s32 %s49, 1
      %s51 = scalar_select %p48, %s49, %s50
      %p54 = pneg %p48
      %p55 = scmp.eq.s32.totalorder %s25, 1
      %p56 = por %p54, %p55
      %p57 = scmp.ne.s32.totalorder %s49, %s52
      %p58 = scmp.eq.s32.totalorder %s25, 0
      %p59 = por %p57, %p58
      %p60 = scmp.ne.s32.totalorder %s49, %s52
      %p61 = scmp.eq.s32.totalorder %s30, 1
      %p62 = por %p60, %p61
      %p63 = scmp.ne.s32.totalorder %s52, %s53
      %p64 = scmp.eq.s32.totalorder %s30, 0
      %p65 = por %p63, %p64
      %p66 = scmp.ne.s32.totalorder %s52, %s53
      %p67 = scmp.eq.s32.totalorder %s31, 1
      %p68 = por %p66, %p67
      %p70 = scmp.ne.s32.totalorder %s53, %s69
      %p71 = scmp.eq.s32.totalorder %s31, 0
      %p72 = por %p70, %p71
      %s74 = sadd.s32 %s73, 1
      %p77 = scmp.eq.s32.totalorder %s25, 1
      %p78 = scmp.ne.s32.totalorder %s73, %s75
      %p79 = scmp.eq.s32.totalorder %s25, 0
      %p80 = por %p78, %p79
      %p81 = scmp.ne.s32.totalorder %s73, %s75
      %p82 = scmp.eq.s32.totalorder %s30, 1
      %p83 = por %p81, %p82
      %p84 = scmp.ne.s32.totalorder %s75, %s76
      %p85 = scmp.eq.s32.totalorder %s30, 0
      %p86 = por %p84, %p85
      %p87 = scmp.ne.s32.totalorder %s75, %s76
      %p88 = scmp.eq.s32.totalorder %s31, 1
      %p89 = por %p87, %p88
      %p91 = scmp.ne.s32.totalorder %s76, %s90
      %p92 = scmp.eq.s32.totalorder %s31, 0
      %p93 = por %p91, %p92
      %s95 = sadd.s32 %s94, 1
      %p98 = scmp.eq.s32.totalorder %s25, 1
      %p99 = scmp.ne.s32.totalorder %s94, %s96
      %p100 = scmp.eq.s32.totalorder %s25, 0
      %p101 = por %p99, %p100
      %p102 = scmp.ne.s32.totalorder %s94, %s96
      %p103 = scmp.eq.s32.totalorder %s30, 1
      %p104 = por %p102, %p103
      %p105 = scmp.ne.s32.totalorder %s96, %s97
      %p106 = scmp.eq.s32.totalorder %s30, 0
      %p107 = por %p105, %p106
      %p108 = scmp.ne.s32.totalorder %s96, %s97
      %p109 = scmp.eq.s32.totalorder %s31, 1
      %p110 = por %p108, %p109
      %p112 = scmp.ne.s32.totalorder %s97, %s111
      %p113 = scmp.eq.s32.totalorder %s31, 0
      %p114 = por %p112, %p113
      %s116 = sadd.s32 %s115, 1
      %p119 = scmp.eq.s32.totalorder %s25, 1
      %p120 = scmp.ne.s32.totalorder %s115, %s117
      %p121 = scmp.eq.s32.totalorder %s25, 0
      %p122 = por %p120, %p121
      %p123 = scmp.ne.s32.totalorder %s115, %s117
      %p124 = scmp.eq.s32.totalorder %s30, 1
      %p125 = por %p123, %p124
      %p126 = scmp.ne.s32.totalorder %s117, %s118
      %p127 = scmp.eq.s32.totalorder %s30, 0
      %p128 = por %p126, %p127
      %p129 = scmp.ne.s32.totalorder %s117, %s118
      %p130 = scmp.eq.s32.totalorder %s31, 1
      %p131 = por %p129, %p130
      %p133 = scmp.ne.s32.totalorder %s118, %s132
      %p134 = scmp.eq.s32.totalorder %s31, 0
      %p135 = por %p133, %p134
      %s137 = sadd.s32 %s136, 1
      %p140 = scmp.eq.s32.totalorder %s25, 1
      %p141 = scmp.ne.s32.totalorder %s136, %s138
      %p142 = scmp.eq.s32.totalorder %s25, 0
      %p143 = por %p141, %p142
      %p144 = scmp.ne.s32.totalorder %s136, %s138
      %p145 = scmp.eq.s32.totalorder %s30, 1
      %p146 = por %p144, %p145
      %p147 = scmp.ne.s32.totalorder %s138, %s139
      %p148 = scmp.eq.s32.totalorder %s30, 0
      %p149 = por %p147, %p148
      %p150 = scmp.ne.s32.totalorder %s138, %s139
      %p151 = scmp.eq.s32.totalorder %s31, 1
      %p152 = por %p150, %p151
      %p154 = scmp.ne.s32.totalorder %s139, %s153
      %p155 = scmp.eq.s32.totalorder %s31, 0
      %p156 = por %p154, %p155
      %s157 = ssub.s32 %s32, %s44
      %s158 = ssub.s32 %s33, %s40
      %s159 = sor.u32 %s157, %s158
      %p160 = scmp.eq.s32.totalorder %s159, 0
      %s162 = sadd.s32 %s161, 1
      %s163 = scalar_select %p160, %s161, %s162
      %p166 = pneg %p160
      %p167 = scmp.eq.s32.totalorder %s25, 1
      %p168 = por %p166, %p167
      %p169 = scmp.ne.s32.totalorder %s161, %s164
      %p170 = scmp.eq.s32.totalorder %s25, 0
      %p171 = por %p169, %p170
      %p172 = scmp.ne.s32.totalorder %s161, %s164
      %p173 = scmp.eq.s32.totalorder %s30, 1
      %p174 = por %p172, %p173
      %p175 = scmp.ne.s32.totalorder %s164, %s165
      %p176 = scmp.eq.s32.totalorder %s30, 0
      %p177 = por %p175, %p176
      %p178 = scmp.ne.s32.totalorder %s164, %s165
      %p179 = scmp.eq.s32.totalorder %s31, 1
      %p180 = por %p178, %p179
      %p182 = scmp.ne.s32.totalorder %s165, %s181
      %p183 = scmp.eq.s32.totalorder %s31, 0
      %p184 = por %p182, %p183
      %s185 = ssub.s32 %s32, %s44
      %s186 = ssub.s32 %s33, %s40
      %s187 = sor.u32 %s185, %s186
      %p188 = scmp.eq.s32.totalorder %s187, 0
      %s190 = sadd.s32 %s189, 1
      %s191 = scalar_select %p188, %s189, %s190
      %p194 = pneg %p188
      %p195 = scmp.eq.s32.totalorder %s25, 1
      %p196 = por %p194, %p195
      %p197 = scmp.ne.s32.totalorder %s189, %s192
      %p198 = scmp.eq.s32.totalorder %s25, 0
      %p199 = por %p197, %p198
      %p200 = scmp.ne.s32.totalorder %s189, %s192
      %p201 = scmp.eq.s32.totalorder %s30, 1
      %p202 = por %p200, %p201
      %p203 = scmp.ne.s32.totalorder %s192, %s193
      %p204 = scmp.eq.s32.totalorder %s30, 0
      %p205 = por %p203, %p204
      %p206 = scmp.ne.s32.totalorder %s192, %s193
      %p207 = scmp.eq.s32.totalorder %s31, 1
      %p208 = por %p206, %p207
      %p210 = scmp.ne.s32.totalorder %s193, %s209
      %p211 = scmp.eq.s32.totalorder %s31, 0
      %p212 = por %p210, %p211
      %s213 = ssub.s32 %s32, %s44
      %s214 = ssub.s32 %s33, %s40
      %s215 = sor.u32 %s213, %s214
      %p216 = scmp.eq.s32.totalorder %s215, 0
      %s218 = sadd.s32 %s217, 1
      %s219 = scalar_select %p216, %s217, %s218
      %p222 = pneg %p216
      %p223 = scmp.eq.s32.totalorder %s25, 1
      %p224 = por %p222, %p223
      %p225 = scmp.ne.s32.totalorder %s217, %s220
      %p226 = scmp.eq.s32.totalorder %s25, 0
      %p227 = por %p225, %p226
      %p228 = scmp.ne.s32.totalorder %s217, %s220
      %p229 = scmp.eq.s32.totalorder %s30, 1
      %p230 = por %p228, %p229
      %p231 = scmp.ne.s32.totalorder %s220, %s221
      %p232 = scmp.eq.s32.totalorder %s30, 0
      %p233 = por %p231, %p232
      %p234 = scmp.ne.s32.totalorder %s220, %s221
      %p235 = scmp.eq.s32.totalorder %s31, 1
      %p236 = por %p234, %p235
      %p238 = scmp.ne.s32.totalorder %s221, %s237
      %p239 = scmp.eq.s32.totalorder %s31, 0
      %p240 = por %p238, %p239
      %p241 = scmp.le.s32.totalorder 1, %s25
      %p242 = scmp.lt.s32.totalorder %s25, 3
      %p243 = pnand %p241, %p242
      %p244 = pneg %p243
      // Predicated region
      $region9: #{tpu_custom_call.1} parent=5 // pred_check
        _
      $region10: #{tpu_custom_call.1} parent=5 // pred_check_branch
        %246 = sbr.rel (%p243) target = $region12
      $region11: #{tpu_custom_call.1} parent=5 // pred_region
        %s247 = ssub.s32 %s25, 1
        // Predicated region
        $region13: #{tpu_custom_call.1} parent=11 // pred_check
          %p248 = pneg %p86
        $region14: #{tpu_custom_call.1} parent=11 // pred_check_branch
          %250 = sbr.rel (%p248) target = $region16
        $region15: #{tpu_custom_call.1} parent=11 // pred_region
          %s252 = ssub.s32 16, 16
          %253 = vsyncadd [#allocation6], %s252
          %s255 = sshll.u32 [#allocation5], 4
          %s256 = int_to_ptr.vmem [resolvable:$true] %s255
          %258 = dma.hbm_to_vmem [thread:$0]  %s1, 16, %s256, [#allocation6]
        $region16: #{tpu_custom_call.1} parent=11 // pred_fallthru
          _
        // Predicated region
        $region17: #{tpu_custom_call.1} parent=11 // pred_check
          %p259 = pneg %p107
        $region18: #{tpu_custom_call.1} parent=11 // pred_check_branch
          %261 = sbr.rel (%p259) target = $region20
        $region19: #{tpu_custom_call.1} parent=11 // pred_region
          %s263 = ssub.s32 16, 16
          %264 = vsyncadd [#allocation6], %s263
          %s266 = sshll.u32 [#allocation7], 4
          %s267 = int_to_ptr.vmem [resolvable:$true] %s266
          %269 = dma.hbm_to_vmem [thread:$0]  %s2, 16, %s267, [#allocation6]
        $region20: #{tpu_custom_call.1} parent=11 // pred_fallthru
          _
        // Predicated region
        $region21: #{tpu_custom_call.1} parent=11 // pred_check
          %p270 = pneg %p128
        $region22: #{tpu_custom_call.1} parent=11 // pred_check_branch
          %272 = sbr.rel (%p270) target = $region24
        $region23: #{tpu_custom_call.1} parent=11 // pred_region
          %s274 = ssub.s32 3072, 3072
          %275 = vsyncadd [#allocation9], %s274
          %s276 = sshll.u32 [#allocation8], 4
          %s277 = int_to_ptr.vmem [resolvable:$true] %s276
          %282 = dma.hbm_to_vmem [thread:$0]  %s3, 3072, %s277, [#allocation9], 192, 192, 12
        $region24: #{tpu_custom_call.1} parent=11 // pred_fallthru
          _
        // Predicated region
        $region25: #{tpu_custom_call.1} parent=11 // pred_check
          %p283 = pneg %p149
        $region26: #{tpu_custom_call.1} parent=11 // pred_check_branch
          %285 = sbr.rel (%p283) target = $region28
        $region27: #{tpu_custom_call.1} parent=11 // pred_region
          %s287 = ssub.s32 48, 48
          %288 = vsyncadd [#allocation9], %s287
          %s290 = sshll.u32 [#allocation10], 4
          %s291 = int_to_ptr.vmem [resolvable:$true] %s290
          %293 = dma.hbm_to_vmem [thread:$0]  %s4, 48, %s291, [#allocation9]
        $region28: #{tpu_custom_call.1} parent=11 // pred_fallthru
          _
      $region12: #{tpu_custom_call.1} parent=5 // pred_fallthru
        _
      %p294 = scmp.lt.s32.totalorder %s25, 2
      // Predicated region
      $region29: #{tpu_custom_call.1} parent=5 // pred_check
        %p295 = pneg %p294
      $region30: #{tpu_custom_call.1} parent=5 // pred_check_branch
        %297 = sbr.rel (%p295) target = $region32
      $region31: #{tpu_custom_call.1} parent=5 // pred_region
        // Predicated region
        $region33: #{tpu_custom_call.1} parent=31 // pred_check
          %p298 = pneg %p59
        $region34: #{tpu_custom_call.1} parent=31 // pred_check_branch
          %300 = sbr.rel (%p298) target = $region36
        $region35: #{tpu_custom_call.1} parent=31 // pred_region
          %s301 = sand.u32 %s49, 1
          %s302 = scalar_lea.sflag [#allocation3], %s301
          %s303 = sand.u32 %s49, 1
          %s304 = smul.addr %s303, 128
          %s305 = scalar_lea.vmem [#allocation2], %s304
          %s306 = smul.u32 16, %s33
          %s308 = ssub.s32 2048, 2048
          %309 = vsyncadd %s302, %s308
          %s310 = smul.addr %s32, 16
          %s311 = sadd.s32 %s306, %s310
          %s312 = smul.addr %s311, 128
          %s313 = scalar_lea.hbm %s0, %s312
          %s314 = sshll.u32 %s305, 4
          %s315 = int_to_ptr.vmem [resolvable:$true] %s314
          %320 = dma.hbm_to_vmem [thread:$0]  %s313, 2048, %s315, %s302, 128, 128, 8
        $region36: #{tpu_custom_call.1} parent=31 // pred_fallthru
          _
      $region32: #{tpu_custom_call.1} parent=5 // pred_fallthru
        _
      %p321 = scmp.le.s32.totalorder 1, %s25
      %p322 = scmp.lt.s32.totalorder %s25, 3
      %p323 = pnand %p321, %p322
      %p324 = pneg %p323
      // Predicated region
      $region37: #{tpu_custom_call.1} parent=5 // pred_check
        _
      $region38: #{tpu_custom_call.1} parent=5 // pred_check_branch
        %326 = sbr.rel (%p323) target = $region40
      $region39: #{tpu_custom_call.1} parent=5 // pred_region
        %s327 = ssub.s32 %s25, 1
        %s328 = sand.u32 %s52, 1
        %s329 = scalar_lea.sflag [#allocation3], %s328
        %s330 = sand.u32 %s52, 1
        %s331 = smul.addr %s330, 128
        %s332 = scalar_lea.vmem [#allocation2], %s331
        // Predicated region
        $region41: #{tpu_custom_call.1} parent=39 // pred_check
          %p333 = pneg %p65
        $region42: #{tpu_custom_call.1} parent=39 // pred_check_branch
          %335 = sbr.rel (%p333) target = $region44
        $region43: #{tpu_custom_call.1} parent=39 // pred_region
          %336 = dma.done %s329, 2048
        $region44: #{tpu_custom_call.1} parent=39 // pred_fallthru
          _
        // Predicated region
        $region45: #{tpu_custom_call.1} parent=39 // pred_check
          %p337 = pneg %p86
        $region46: #{tpu_custom_call.1} parent=39 // pred_check_branch
          %339 = sbr.rel (%p337) target = $region48
        $region47: #{tpu_custom_call.1} parent=39 // pred_region
          %340 = dma.done [#allocation6], 16
        $region48: #{tpu_custom_call.1} parent=39 // pred_fallthru
          _
        // Predicated region
        $region49: #{tpu_custom_call.1} parent=39 // pred_check
          %p341 = pneg %p107
        $region50: #{tpu_custom_call.1} parent=39 // pred_check_branch
          %343 = sbr.rel (%p341) target = $region52
        $region51: #{tpu_custom_call.1} parent=39 // pred_region
          %344 = dma.done [#allocation6], 16
        $region52: #{tpu_custom_call.1} parent=39 // pred_fallthru
          _
        // Predicated region
        $region53: #{tpu_custom_call.1} parent=39 // pred_check
          %p345 = pneg %p128
        $region54: #{tpu_custom_call.1} parent=39 // pred_check_branch
          %347 = sbr.rel (%p345) target = $region56
        $region55: #{tpu_custom_call.1} parent=39 // pred_region
          %348 = dma.done [#allocation9], 3072
        $region56: #{tpu_custom_call.1} parent=39 // pred_fallthru
          _
        // Predicated region
        $region57: #{tpu_custom_call.1} parent=39 // pred_check
          %p349 = pneg %p149
        $region58: #{tpu_custom_call.1} parent=39 // pred_check_branch
          %351 = sbr.rel (%p349) target = $region60
        $region59: #{tpu_custom_call.1} parent=39 // pred_region
          %352 = dma.done [#allocation9], 48
        $region60: #{tpu_custom_call.1} parent=39 // pred_fallthru
          _
        %s353 = sand.u32 %s52, 1
        %s354 = scalar_lea.sflag [#allocation3], %s353
        %s355 = sand.u32 %s52, 1
        %s356 = smul.addr %s355, 128
        %s357 = scalar_lea.vmem [#allocation2], %s356
        %p358 = pneg %p65
        %p359 = pneg %p62
        %p360 = pneg %p86
        %p361 = pneg %p83
        %p362 = pneg %p107
        %p363 = pneg %p104
        %p364 = pneg %p128
        %p365 = pneg %p125
        %p366 = pneg %p149
        %p367 = pneg %p146
        %p368 = pneg %p177
        %p369 = pneg %p174
        %s370 = sand.u32 %s164, 1
        %s371 = scalar_lea.sflag [#allocation4], %s370
        %s372 = sand.u32 %s164, 1
        %s373 = smul.addr %s372, 64
        %s374 = scalar_lea.vmem [#allocation11], %s373
        %p375 = pneg %p205
        %p376 = pneg %p202
        %s377 = sand.u32 %s30, 1
        %s378 = scalar_lea.sflag [#allocation13], %s377
        %s379 = sand.u32 %s192, 1
        %s380 = smul.addr %s379, 64
        %s381 = scalar_lea.vmem [#allocation12], %s380
        %p382 = pneg %p233
        %p383 = pneg %p230
        %s384 = sand.u32 %s30, 1
        %s385 = scalar_lea.sflag [#allocation13], %s384
        %s386 = sand.u32 %s220, 1
        %s387 = smul.addr %s386, 64
        %s388 = scalar_lea.vmem [#allocation14], %s387
        %s389 = smul.u32 16, %s35
        %s390 = smul.u32 16, %s35
        %s391 = smul.u32 16, %s35
        %s392 = smul.u32 16, %s35
        %v394 = vld [vmem:[%s332] sm:$0xff]
        %v395 = vld [vmem:[%s332 + $0x8] sm:$0xff]
        %v396 = vld [vmem:[%s332 + $0x10] sm:$0xff]
        %v397 = vld [vmem:[%s332 + $0x18] sm:$0xff]
        %v398 = vld [vmem:[%s332 + $0x20] sm:$0xff]
        %v399 = vld [vmem:[%s332 + $0x28] sm:$0xff]
        %v400 = vld [vmem:[%s332 + $0x30] sm:$0xff]
        %v401 = vld [vmem:[%s332 + $0x38] sm:$0xff]
        %v402 = vld [vmem:[%s332 + $0x40] sm:$0xff]
        %v403 = vld [vmem:[%s332 + $0x48] sm:$0xff]
        %v404 = vld [vmem:[%s332 + $0x50] sm:$0xff]
        %v405 = vld [vmem:[%s332 + $0x58] sm:$0xff]
        %v406 = vld [vmem:[%s332 + $0x60] sm:$0xff]
        %v407 = vld [vmem:[%s332 + $0x68] sm:$0xff]
        %v408 = vld [vmem:[%s332 + $0x70] sm:$0xff]
        %v409 = vld [vmem:[%s332 + $0x78] sm:$0xff]
        %v410 = vld [vmem:[#allocation5] sm:$0x1]
        %v411 = vld [vmem:[#allocation7] sm:$0x1]
        %412 = vadd.xlane.f32.xlu0 %v394
        %v413 = vpop.xlane.xlu0 %412
        %414 = vadd.xlane.f32.xlu0 %v395
        %v415 = vpop.xlane.xlu0 %414
        %416 = vadd.xlane.f32.xlu0 %v396
        %v417 = vpop.xlane.xlu0 %416
        %418 = vadd.xlane.f32.xlu0 %v397
        %v419 = vpop.xlane.xlu0 %418
        %420 = vadd.xlane.f32.xlu0 %v398
        %v421 = vpop.xlane.xlu0 %420
        %422 = vadd.xlane.f32.xlu0 %v399
        %v423 = vpop.xlane.xlu0 %422
        %424 = vadd.xlane.f32.xlu0 %v400
        %v425 = vpop.xlane.xlu0 %424
        %426 = vadd.xlane.f32.xlu0 %v401
        %v427 = vpop.xlane.xlu0 %426
        %428 = vadd.xlane.f32.xlu0 %v402
        %v429 = vpop.xlane.xlu0 %428
        %430 = vadd.xlane.f32.xlu0 %v403
        %v431 = vpop.xlane.xlu0 %430
        %432 = vadd.xlane.f32.xlu0 %v404
        %v433 = vpop.xlane.xlu0 %432
        %434 = vadd.xlane.f32.xlu0 %v405
        %v435 = vpop.xlane.xlu0 %434
        %436 = vadd.xlane.f32.xlu0 %v406
        %v437 = vpop.xlane.xlu0 %436
        %438 = vadd.xlane.f32.xlu0 %v407
        %v439 = vpop.xlane.xlu0 %438
        %440 = vadd.xlane.f32.xlu0 %v408
        %v441 = vpop.xlane.xlu0 %440
        %442 = vadd.xlane.f32.xlu0 %v409
        %v443 = vpop.xlane.xlu0 %442
        %v444 = vrcp.pop 128.0
        %v445 = vmul.f32 %v413, %v444
        %v446 = vmul.f32 %v415, %v444
        %v447 = vmul.f32 %v417, %v444
        %v448 = vmul.f32 %v419, %v444
        %v449 = vmul.f32 %v421, %v444
        %v450 = vmul.f32 %v423, %v444
        %v451 = vmul.f32 %v425, %v444
        %v452 = vmul.f32 %v427, %v444
        %v453 = vmul.f32 %v429, %v444
        %v454 = vmul.f32 %v431, %v444
        %v455 = vmul.f32 %v433, %v444
        %v456 = vmul.f32 %v435, %v444
        %v457 = vmul.f32 %v437, %v444
        %v458 = vmul.f32 %v439, %v444
        %v459 = vmul.f32 %v441, %v444
        %v460 = vmul.f32 %v443, %v444
        %v461 = vsub.f32 %v394, %v445
        %v462 = vsub.f32 %v395, %v446
        %v463 = vsub.f32 %v396, %v447
        %v464 = vsub.f32 %v397, %v448
        %v465 = vsub.f32 %v398, %v449
        %v466 = vsub.f32 %v399, %v450
        %v467 = vsub.f32 %v400, %v451
        %v468 = vsub.f32 %v401, %v452
        %v469 = vsub.f32 %v402, %v453
        %v470 = vsub.f32 %v403, %v454
        %v471 = vsub.f32 %v404, %v455
        %v472 = vsub.f32 %v405, %v456
        %v473 = vsub.f32 %v406, %v457
        %v474 = vsub.f32 %v407, %v458
        %v475 = vsub.f32 %v408, %v459
        %v476 = vsub.f32 %v409, %v460
        %v477 = vmul.f32 %v461, %v461
        %v478 = vmul.f32 %v462, %v462
        %v479 = vmul.f32 %v463, %v463
        %v480 = vmul.f32 %v464, %v464
        %v481 = vmul.f32 %v465, %v465
        %v482 = vmul.f32 %v466, %v466
        %v483 = vmul.f32 %v467, %v467
        %v484 = vmul.f32 %v468, %v468
        %v485 = vmul.f32 %v469, %v469
        %v486 = vmul.f32 %v470, %v470
        %v487 = vmul.f32 %v471, %v471
        %v488 = vmul.f32 %v472, %v472
        %v489 = vmul.f32 %v473, %v473
        %v490 = vmul.f32 %v474, %v474
        %v491 = vmul.f32 %v475, %v475
        %v492 = vmul.f32 %v476, %v476
        %493 = vadd.xlane.f32.xlu0 %v477
        %v494 = vpop.xlane.xlu0 %493
        %495 = vadd.xlane.f32.xlu0 %v478
        %v496 = vpop.xlane.xlu0 %495
        %497 = vadd.xlane.f32.xlu0 %v479
        %v498 = vpop.xlane.xlu0 %497
        %499 = vadd.xlane.f32.xlu0 %v480
        %v500 = vpop.xlane.xlu0 %499
        %501 = vadd.xlane.f32.xlu0 %v481
        %v502 = vpop.xlane.xlu0 %501
        %503 = vadd.xlane.f32.xlu0 %v482
        %v504 = vpop.xlane.xlu0 %503
        %505 = vadd.xlane.f32.xlu0 %v483
        %v506 = vpop.xlane.xlu0 %505
        %507 = vadd.xlane.f32.xlu0 %v484
        %v508 = vpop.xlane.xlu0 %507
        %509 = vadd.xlane.f32.xlu0 %v485
        %v510 = vpop.xlane.xlu0 %509
        %511 = vadd.xlane.f32.xlu0 %v486
        %v512 = vpop.xlane.xlu0 %511
        %513 = vadd.xlane.f32.xlu0 %v487
        %v514 = vpop.xlane.xlu0 %513
        %515 = vadd.xlane.f32.xlu0 %v488
        %v516 = vpop.xlane.xlu0 %515
        %517 = vadd.xlane.f32.xlu0 %v489
        %v518 = vpop.xlane.xlu0 %517
        %519 = vadd.xlane.f32.xlu0 %v490
        %v520 = vpop.xlane.xlu0 %519
        %521 = vadd.xlane.f32.xlu0 %v491
        %v522 = vpop.xlane.xlu0 %521
        %523 = vadd.xlane.f32.xlu0 %v492
        %v524 = vpop.xlane.xlu0 %523
        %v525 = vmul.f32 %v494, %v444
        %v526 = vmul.f32 %v496, %v444
        %v527 = vmul.f32 %v498, %v444
        %v528 = vmul.f32 %v500, %v444
        %v529 = vmul.f32 %v502, %v444
        %v530 = vmul.f32 %v504, %v444
        %v531 = vmul.f32 %v506, %v444
        %v532 = vmul.f32 %v508, %v444
        %v533 = vmul.f32 %v510, %v444
        %v534 = vmul.f32 %v512, %v444
        %v535 = vmul.f32 %v514, %v444
        %v536 = vmul.f32 %v516, %v444
        %v537 = vmul.f32 %v518, %v444
        %v538 = vmul.f32 %v520, %v444
        %v539 = vmul.f32 %v522, %v444
        %v540 = vmul.f32 %v524, %v444
        %v541 = vadd.f32 %v525, 1e-05
        %v542 = vadd.f32 %v526, 1e-05
        %v543 = vadd.f32 %v527, 1e-05
        %v544 = vadd.f32 %v528, 1e-05
        %v545 = vadd.f32 %v529, 1e-05
        %v546 = vadd.f32 %v530, 1e-05
        %v547 = vadd.f32 %v531, 1e-05
        %v548 = vadd.f32 %v532, 1e-05
        %v549 = vadd.f32 %v533, 1e-05
        %v550 = vadd.f32 %v534, 1e-05
        %v551 = vadd.f32 %v535, 1e-05
        %v552 = vadd.f32 %v536, 1e-05
        %v553 = vadd.f32 %v537, 1e-05
        %v554 = vadd.f32 %v538, 1e-05
        %v555 = vadd.f32 %v539, 1e-05
        %v556 = vadd.f32 %v540, 1e-05
        %v557 = vrsqrt.pop %v541
        %v558 = vrsqrt.pop %v542
        %v559 = vrsqrt.pop %v543
        %v560 = vrsqrt.pop %v544
        %v561 = vrsqrt.pop %v545
        %v562 = vrsqrt.pop %v546
        %v563 = vrsqrt.pop %v547
        %v564 = vrsqrt.pop %v548
        %v565 = vrsqrt.pop %v549
        %v566 = vrsqrt.pop %v550
        %v567 = vrsqrt.pop %v551
        %v568 = vrsqrt.pop %v552
        %v569 = vrsqrt.pop %v553
        %v570 = vrsqrt.pop %v554
        %v571 = vrsqrt.pop %v555
        %v572 = vrsqrt.pop %v556
        %v573 = vmul.f32 %v461, %v557
        %v574 = vmul.f32 %v462, %v558
        %v575 = vmul.f32 %v463, %v559
        %v576 = vmul.f32 %v464, %v560
        %v577 = vmul.f32 %v465, %v561
        %v578 = vmul.f32 %v466, %v562
        %v579 = vmul.f32 %v467, %v563
        %v580 = vmul.f32 %v468, %v564
        %v581 = vmul.f32 %v469, %v565
        %v582 = vmul.f32 %v470, %v566
        %v583 = vmul.f32 %v471, %v567
        %v584 = vmul.f32 %v472, %v568
        %v585 = vmul.f32 %v473, %v569
        %v586 = vmul.f32 %v474, %v570
        %v587 = vmul.f32 %v475, %v571
        %v588 = vmul.f32 %v476, %v572
        %v590 = vlaneseq
        %v591 = vshrl.u32 %v590, 7
        %v592 = vsub.s32 0, %v591
        %v593 = vrot.slane %v410, %v592
        %v595 = vmul.f32 %v573, %v593
        %v596 = vmul.f32 %v574, %v593
        %v597 = vmul.f32 %v575, %v593
        %v598 = vmul.f32 %v576, %v593
        %v599 = vmul.f32 %v577, %v593
        %v600 = vmul.f32 %v578, %v593
        %v601 = vmul.f32 %v579, %v593
        %v602 = vmul.f32 %v580, %v593
        %v603 = vmul.f32 %v581, %v593
        %v604 = vmul.f32 %v582, %v593
        %v605 = vmul.f32 %v583, %v593
        %v606 = vmul.f32 %v584, %v593
        %v607 = vmul.f32 %v585, %v593
        %v608 = vmul.f32 %v586, %v593
        %v609 = vmul.f32 %v587, %v593
        %v610 = vmul.f32 %v588, %v593
        %v612 = vlaneseq
        %v613 = vshrl.u32 %v612, 7
        %v614 = vsub.s32 0, %v613
        %v615 = vrot.slane %v411, %v614
        %v617 = vadd.f32 %v595, %v615
        %v618 = vadd.f32 %v596, %v615
        %v619 = vadd.f32 %v597, %v615
        %v620 = vadd.f32 %v598, %v615
        %v621 = vadd.f32 %v599, %v615
        %v622 = vadd.f32 %v600, %v615
        %v623 = vadd.f32 %v601, %v615
        %v624 = vadd.f32 %v602, %v615
        %v625 = vadd.f32 %v603, %v615
        %v626 = vadd.f32 %v604, %v615
        %v627 = vadd.f32 %v605, %v615
        %v628 = vadd.f32 %v606, %v615
        %v629 = vadd.f32 %v607, %v615
        %v630 = vadd.f32 %v608, %v615
        %v631 = vadd.f32 %v609, %v615
        %v632 = vadd.f32 %v610, %v615
        %v633 = vpack.c.bf16 %v618, %v617
        %v634 = vpack.c.bf16 %v620, %v619
        %v635 = vpack.c.bf16 %v622, %v621
        %v636 = vpack.c.bf16 %v624, %v623
        %v637 = vpack.c.bf16 %v626, %v625
        %v638 = vpack.c.bf16 %v628, %v627
        %v639 = vpack.c.bf16 %v630, %v629
        %v640 = vpack.c.bf16 %v632, %v631
        %v641 = vld [vmem:[#allocation8] sm:$0xff]
        %v642 = vld [vmem:[#allocation8 + $0x8] sm:$0xf]
        %v643 = vld [vmem:[#allocation8 + $0xc] sm:$0xff]
        %v644 = vld [vmem:[#allocation8 + $0x14] sm:$0xf]
        %v645 = vld [vmem:[#allocation8 + $0x18] sm:$0xff]
        %v646 = vld [vmem:[#allocation8 + $0x20] sm:$0xf]
        %v647 = vld [vmem:[#allocation8 + $0x24] sm:$0xff]
        %v648 = vld [vmem:[#allocation8 + $0x2c] sm:$0xf]
        %v649 = vld [vmem:[#allocation8 + $0x30] sm:$0xff]
        %v650 = vld [vmem:[#allocation8 + $0x38] sm:$0xf]
        %v651 = vld [vmem:[#allocation8 + $0x3c] sm:$0xff]
        %v652 = vld [vmem:[#allocation8 + $0x44] sm:$0xf]
        %v653 = vld [vmem:[#allocation8 + $0x48] sm:$0xff]
        %v654 = vld [vmem:[#allocation8 + $0x50] sm:$0xf]
        %v655 = vld [vmem:[#allocation8 + $0x54] sm:$0xff]
        %v656 = vld [vmem:[#allocation8 + $0x5c] sm:$0xf]
        %v657 = vld [vmem:[#allocation8 + $0x60] sm:$0xff]
        %v658 = vld [vmem:[#allocation8 + $0x68] sm:$0xf]
        %v659 = vld [vmem:[#allocation8 + $0x6c] sm:$0xff]
        %v660 = vld [vmem:[#allocation8 + $0x74] sm:$0xf]
        %v661 = vld [vmem:[#allocation8 + $0x78] sm:$0xff]
        %v662 = vld [vmem:[#allocation8 + $0x80] sm:$0xf]
        %v663 = vld [vmem:[#allocation8 + $0x84] sm:$0xff]
        %v664 = vld [vmem:[#allocation8 + $0x8c] sm:$0xf]
        %v665 = vld [vmem:[#allocation8 + $0x90] sm:$0xff]
        %v666 = vld [vmem:[#allocation8 + $0x98] sm:$0xf]
        %v667 = vld [vmem:[#allocation8 + $0x9c] sm:$0xff]
        %v668 = vld [vmem:[#allocation8 + $0xa4] sm:$0xf]
        %v669 = vld [vmem:[#allocation8 + $0xa8] sm:$0xff]
        %v670 = vld [vmem:[#allocation8 + $0xb0] sm:$0xf]
        %v671 = vld [vmem:[#allocation8 + $0xb4] sm:$0xff]
        %v672 = vld [vmem:[#allocation8 + $0xbc] sm:$0xf]
        %v673 = vld [vmem:[#allocation10] sm:$0x7]
        %v675 = vlaneseq
        %v676 = vshrl.u32 %v675, 7
        %v677 = vsub.s32 0, %v676
        %v678 = vrot.slane %v673, %v677
        %v679 = vlaneseq
        %v680 = vshrl.u32 %v679, 7
        %v681 = vsub.s32 1, %v680
        %v682 = vrot.slane %v673, %v681
        %v683 = vlaneseq
        %v684 = vshrl.u32 %v683, 7
        %v685 = vsub.s32 2, %v684
        %v686 = vrot.slane %v673, %v685
        %v722 = vunpack.c.l.b16 %v641
        %v723 = vunpack.c.h.b16 %v641
        %v724 = vunpack.c.l.b16 %v642
        %v725 = vunpack.c.l.b16 %v643
        %v726 = vunpack.c.h.b16 %v643
        %v727 = vunpack.c.l.b16 %v644
        %v728 = vunpack.c.l.b16 %v645
        %v729 = vunpack.c.h.b16 %v645
        %v730 = vunpack.c.l.b16 %v646
        %v731 = vunpack.c.l.b16 %v647
        %v732 = vunpack.c.h.b16 %v647
        %v733 = vunpack.c.l.b16 %v648
        %v734 = vunpack.c.l.b16 %v649
        %v735 = vunpack.c.h.b16 %v649
        %v736 = vunpack.c.l.b16 %v650
        %v737 = vunpack.c.l.b16 %v651
        %v738 = vunpack.c.h.b16 %v651
        %v739 = vunpack.c.l.b16 %v652
        %v740 = vunpack.c.l.b16 %v653
        %v741 = vunpack.c.h.b16 %v653
        %v742 = vunpack.c.l.b16 %v654
        %v743 = vunpack.c.l.b16 %v655
        %v744 = vunpack.c.h.b16 %v655
        %v745 = vunpack.c.l.b16 %v656
        %v746 = vunpack.c.l.b16 %v657
        %v747 = vunpack.c.h.b16 %v657
        %v748 = vunpack.c.l.b16 %v658
        %v749 = vunpack.c.l.b16 %v659
        %v750 = vunpack.c.h.b16 %v659
        %v751 = vunpack.c.l.b16 %v660
        %v752 = vunpack.c.l.b16 %v661
        %v753 = vunpack.c.h.b16 %v661
        %v754 = vunpack.c.l.b16 %v662
        %v755 = vunpack.c.l.b16 %v663
        %v756 = vunpack.c.h.b16 %v663
        %v757 = vunpack.c.l.b16 %v664
        %v758 = vunpack.c.l.b16 %v665
        %v759 = vunpack.c.h.b16 %v665
        %v760 = vunpack.c.l.b16 %v666
        %v761 = vunpack.c.l.b16 %v667
        %v762 = vunpack.c.h.b16 %v667
        %v763 = vunpack.c.l.b16 %v668
        %v764 = vunpack.c.l.b16 %v669
        %v765 = vunpack.c.h.b16 %v669
        %v766 = vunpack.c.l.b16 %v670
        %v767 = vunpack.c.l.b16 %v671
        %v768 = vunpack.c.h.b16 %v671
        %v769 = vunpack.c.l.b16 %v672
        %v770 = vpack.c.b16 %v725, %v722
        %v771 = vpack.c.b16 %v726, %v723
        %v772 = vpack.c.b16 %v727, %v724
        %v773 = vpack.c.b16 %v731, %v728
        %v774 = vpack.c.b16 %v732, %v729
        %v775 = vpack.c.b16 %v733, %v730
        %v776 = vpack.c.b16 %v737, %v734
        %v777 = vpack.c.b16 %v738, %v735
        %v778 = vpack.c.b16 %v739, %v736
        %v779 = vpack.c.b16 %v743, %v740
        %v780 = vpack.c.b16 %v744, %v741
        %v781 = vpack.c.b16 %v745, %v742
        %v782 = vpack.c.b16 %v749, %v746
        %v783 = vpack.c.b16 %v750, %v747
        %v784 = vpack.c.b16 %v751, %v748
        %v785 = vpack.c.b16 %v755, %v752
        %v786 = vpack.c.b16 %v756, %v753
        %v787 = vpack.c.b16 %v757, %v754
        %v788 = vpack.c.b16 %v761, %v758
        %v789 = vpack.c.b16 %v762, %v759
        %v790 = vpack.c.b16 %v763, %v760
        %v791 = vpack.c.b16 %v767, %v764
        %v792 = vpack.c.b16 %v768, %v765
        %v793 = vpack.c.b16 %v769, %v766
        %818 = vmatprep.subr.bf16.mxu0 %v771
        %819 = vmatpush1.bf16.msra.mxu0 %v770
        %820 = vmatprep.subr.bf16.mxu0 %v774
        %821 = vmatpush1.bf16.msra.mxu0 %v773
        %822 = vmatprep.subr.bf16.mxu0 %v777
        %823 = vmatpush1.bf16.msra.mxu0 %v776
        %824 = vmatprep.subr.bf16.mxu0 %v780
        %825 = vmatpush1.bf16.msra.mxu0 %v779
        %826 = vmatprep.subr.bf16.mxu0 %v783
        %827 = vmatpush1.bf16.msra.mxu0 %v782
        %828 = vmatprep.subr.bf16.mxu0 %v786
        %829 = vmatpush1.bf16.msra.mxu0 %v785
        %830 = vmatprep.subr.bf16.mxu0 %v789
        %831 = vmatpush1.bf16.msra.mxu0 %v788
        %832 = vmatprep.subr.bf16.mxu0 %v792
        %833 = vmatpush1.bf16.msra.mxu0 %v791
        %834 = vmatprep.subr.bf16.mxu0 0
        %835 = vmatpush1.bf16.msra.mxu0 0
        %836 = vmatprep.subr.bf16.mxu0 0
        %837 = vmatpush1.bf16.msra.mxu0 0
        %838 = vmatprep.subr.bf16.mxu0 0
        %839 = vmatpush1.bf16.msra.mxu0 0
        %840 = vmatprep.subr.bf16.mxu0 0
        %841 = vmatpush1.bf16.msra.mxu0 0
        %842 = vmatprep.subr.bf16.mxu0 0
        %843 = vmatpush1.bf16.msra.mxu0 0
        %844 = vmatprep.subr.bf16.mxu0 0
        %845 = vmatpush1.bf16.msra.mxu0 0
        %846 = vmatprep.subr.bf16.mxu0 0
        %847 = vmatpush1.bf16.msra.mxu0 0
        %848 = vmatprep.subr.bf16.mxu0 0
        %849 = vmatpush1.bf16.msra.mxu0 0
        %850 = vmatprep.mubr.bf16.mxu0 0
        %851 = vmatmul.mubr.bf16.gmra.mrb[0].mxu0 %v633
        %v852 = vpop.f32.mrb[0].mxu0
        %v853 = vadd.f32 %v678, %v852
        %v854 = vpop.f32.mrb[0].mxu0
        %v855 = vadd.f32 %v682, %v854
        %v856 = vpop.f32.mrb[0].mxu0
        %v857 = vadd.f32 %v678, %v856
        %v858 = vpop.f32.mrb[0].mxu0
        %v859 = vadd.f32 %v682, %v858
        %860 = vmatprep.mubr.bf16.mxu0 0
        %861 = vmatmul.mubr.bf16.gmra.mrb[0].mxu0 %v634
        %v862 = vpop.f32.mrb[0].mxu0
        %v863 = vadd.f32 %v678, %v862
        %v864 = vpop.f32.mrb[0].mxu0
        %v865 = vadd.f32 %v682, %v864
        %v866 = vpop.f32.mrb[0].mxu0
        %v867 = vadd.f32 %v678, %v866
        %v868 = vpop.f32.mrb[0].mxu0
        %v869 = vadd.f32 %v682, %v868
        %870 = vmatprep.mubr.bf16.mxu0 0
        %871 = vmatmul.mubr.bf16.gmra.mrb[0].mxu0 %v635
        %v872 = vpop.f32.mrb[0].mxu0
        %v873 = vadd.f32 %v678, %v872
        %v874 = vpop.f32.mrb[0].mxu0
        %v875 = vadd.f32 %v682, %v874
        %v876 = vpop.f32.mrb[0].mxu0
        %v877 = vadd.f32 %v678, %v876
        %v878 = vpop.f32.mrb[0].mxu0
        %v879 = vadd.f32 %v682, %v878
        %880 = vmatprep.mubr.bf16.mxu0 0
        %881 = vmatmul.mubr.bf16.gmra.mrb[0].mxu0 %v636
        %v882 = vpop.f32.mrb[0].mxu0
        %v883 = vadd.f32 %v678, %v882
        %v884 = vpop.f32.mrb[0].mxu0
        %v885 = vadd.f32 %v682, %v884
        %v886 = vpop.f32.mrb[0].mxu0
        %v887 = vadd.f32 %v678, %v886
        %v888 = vpop.f32.mrb[0].mxu0
        %v889 = vadd.f32 %v682, %v888
        %890 = vmatprep.mubr.bf16.mxu0 0
        %891 = vmatmul.mubr.bf16.gmra.mrb[0].mxu0 %v637
        %v892 = vpop.f32.mrb[0].mxu0
        %v893 = vadd.f32 %v678, %v892
        %v894 = vpop.f32.mrb[0].mxu0
        %v895 = vadd.f32 %v682, %v894
        %v896 = vpop.f32.mrb[0].mxu0
        %v897 = vadd.f32 %v678, %v896
        %v898 = vpop.f32.mrb[0].mxu0
        %v899 = vadd.f32 %v682, %v898
        %900 = vmatprep.mubr.bf16.mxu0 0
        %901 = vmatmul.mubr.bf16.gmra.mrb[0].mxu0 %v638
        %v902 = vpop.f32.mrb[0].mxu0
        %v903 = vadd.f32 %v678, %v902
        %v904 = vpop.f32.mrb[0].mxu0
        %v905 = vadd.f32 %v682, %v904
        %v906 = vpop.f32.mrb[0].mxu0
        %v907 = vadd.f32 %v678, %v906
        %v908 = vpop.f32.mrb[0].mxu0
        %v909 = vadd.f32 %v682, %v908
        %910 = vmatprep.mubr.bf16.mxu0 0
        %911 = vmatmul.mubr.bf16.gmra.mrb[0].mxu0 %v639
        %v912 = vpop.f32.mrb[0].mxu0
        %v913 = vadd.f32 %v678, %v912
        %v914 = vpop.f32.mrb[0].mxu0
        %v915 = vadd.f32 %v682, %v914
        %v916 = vpop.f32.mrb[0].mxu0
        %v917 = vadd.f32 %v678, %v916
        %v918 = vpop.f32.mrb[0].mxu0
        %v919 = vadd.f32 %v682, %v918
        %920 = vmatprep.mubr.bf16.mxu0 0
        %921 = vmatmul.mubr.bf16.gmra.mrb[0].mxu0 %v640
        %v922 = vpop.f32.mrb[0].mxu0
        %v923 = vadd.f32 %v678, %v922
        %v924 = vpop.f32.mrb[0].mxu0
        %v925 = vadd.f32 %v682, %v924
        %v926 = vpop.f32.mrb[0].mxu0
        %v927 = vadd.f32 %v678, %v926
        %v928 = vpop.f32.mrb[0].mxu0
        %v929 = vadd.f32 %v682, %v928
        %930 = vdwg.mxu0
        %931 = vmatprep.subr.bf16.mxu0 0
        %932 = vmatpush1.bf16.msra.mxu0 %v772
        %933 = vmatprep.subr.bf16.mxu0 0
        %934 = vmatpush1.bf16.msra.mxu0 %v775
        %935 = vmatprep.subr.bf16.mxu0 0
        %936 = vmatpush1.bf16.msra.mxu0 %v778
        %937 = vmatprep.subr.bf16.mxu0 0
        %938 = vmatpush1.bf16.msra.mxu0 %v781
        %939 = vmatprep.subr.bf16.mxu0 0
        %940 = vmatpush1.bf16.msra.mxu0 %v784
        %941 = vmatprep.subr.bf16.mxu0 0
        %942 = vmatpush1.bf16.msra.mxu0 %v787
        %943 = vmatprep.subr.bf16.mxu0 0
        %944 = vmatpush1.bf16.msra.mxu0 %v790
        %945 = vmatprep.subr.bf16.mxu0 0
        %946 = vmatpush1.bf16.msra.mxu0 %v793
        %947 = vmatprep.subr.bf16.mxu0 0
        %948 = vmatpush1.bf16.msra.mxu0 0
        %949 = vmatprep.subr.bf16.mxu0 0
        %950 = vmatpush1.bf16.msra.mxu0 0
        %951 = vmatprep.subr.bf16.mxu0 0
        %952 = vmatpush1.bf16.msra.mxu0 0
        %953 = vmatprep.subr.bf16.mxu0 0
        %954 = vmatpush1.bf16.msra.mxu0 0
        %955 = vmatprep.subr.bf16.mxu0 0
        %956 = vmatpush1.bf16.msra.mxu0 0
        %957 = vmatprep.subr.bf16.mxu0 0
        %958 = vmatpush1.bf16.msra.mxu0 0
        %959 = vmatprep.subr.bf16.mxu0 0
        %960 = vmatpush1.bf16.msra.mxu0 0
        %961 = vmatprep.subr.bf16.mxu0 0
        %962 = vmatpush1.bf16.msra.mxu0 0
        %963 = vmatprep.mubr.bf16.mxu0 0
        %964 = vmatmul.mubr.bf16.gmra.mrb[0].mxu0 %v633
        %v965 = vpop.f32.mrb[0].mxu0
        %v966 = vadd.f32 %v686, %v965
        %v967 = vpop.f32.mrb[0].mxu0
        %v968 = vpop.f32.mrb[0].mxu0
        %v969 = vadd.f32 %v686, %v968
        %v970 = vpop.f32.mrb[0].mxu0
        %971 = vmatprep.mubr.bf16.mxu0 0
        %972 = vmatmul.mubr.bf16.gmra.mrb[0].mxu0 %v634
        %v973 = vpop.f32.mrb[0].mxu0
        %v974 = vadd.f32 %v686, %v973
        %v975 = vpop.f32.mrb[0].mxu0
        %v976 = vpop.f32.mrb[0].mxu0
        %v977 = vadd.f32 %v686, %v976
        %v978 = vpop.f32.mrb[0].mxu0
        %979 = vmatprep.mubr.bf16.mxu0 0
        %980 = vmatmul.mubr.bf16.gmra.mrb[0].mxu0 %v635
        %v981 = vpop.f32.mrb[0].mxu0
        %v982 = vadd.f32 %v686, %v981
        %v983 = vpop.f32.mrb[0].mxu0
        %v984 = vpop.f32.mrb[0].mxu0
        %v985 = vadd.f32 %v686, %v984
        %v986 = vpop.f32.mrb[0].mxu0
        %987 = vmatprep.mubr.bf16.mxu0 0
        %988 = vmatmul.mubr.bf16.gmra.mrb[0].mxu0 %v636
        %v989 = vpop.f32.mrb[0].mxu0
        %v990 = vadd.f32 %v686, %v989
        %v991 = vpop.f32.mrb[0].mxu0
        %v992 = vpop.f32.mrb[0].mxu0
        %v993 = vadd.f32 %v686, %v992
        %v994 = vpop.f32.mrb[0].mxu0
        %995 = vmatprep.mubr.bf16.mxu0 0
        %996 = vmatmul.mubr.bf16.gmra.mrb[0].mxu0 %v637
        %v997 = vpop.f32.mrb[0].mxu0
        %v998 = vadd.f32 %v686, %v997
        %v999 = vpop.f32.mrb[0].mxu0
        %v1000 = vpop.f32.mrb[0].mxu0
        %v1001 = vadd.f32 %v686, %v1000
        %v1002 = vpop.f32.mrb[0].mxu0
        %1003 = vmatprep.mubr.bf16.mxu0 0
        %1004 = vmatmul.mubr.bf16.gmra.mrb[0].mxu0 %v638
        %v1005 = vpop.f32.mrb[0].mxu0
        %v1006 = vadd.f32 %v686, %v1005
        %v1007 = vpop.f32.mrb[0].mxu0
        %v1008 = vpop.f32.mrb[0].mxu0
        %v1009 = vadd.f32 %v686, %v1008
        %v1010 = vpop.f32.mrb[0].mxu0
        %1011 = vmatprep.mubr.bf16.mxu0 0
        %1012 = vmatmul.mubr.bf16.gmra.mrb[0].mxu0 %v639
        %v1013 = vpop.f32.mrb[0].mxu0
        %v1014 = vadd.f32 %v686, %v1013
        %v1015 = vpop.f32.mrb[0].mxu0
        %v1016 = vpop.f32.mrb[0].mxu0
        %v1017 = vadd.f32 %v686, %v1016
        %v1018 = vpop.f32.mrb[0].mxu0
        %1019 = vmatprep.mubr.bf16.mxu0 0
        %1020 = vmatmul.mubr.bf16.gmra.mrb[0].mxu0 %v640
        %v1021 = vpop.f32.mrb[0].mxu0
        %v1022 = vadd.f32 %v686, %v1021
        %v1023 = vpop.f32.mrb[0].mxu0
        %v1024 = vpop.f32.mrb[0].mxu0
        %v1025 = vadd.f32 %v686, %v1024
        %v1026 = vpop.f32.mrb[0].mxu0
        %1027 = vdwg.mxu0
        %v1028 = vmul.f32 %v853, 0.17677669
        %v1029 = vmul.f32 %v857, 0.17677669
        %v1030 = vmul.f32 %v863, 0.17677669
        %v1031 = vmul.f32 %v867, 0.17677669
        %v1032 = vmul.f32 %v873, 0.17677669
        %v1033 = vmul.f32 %v877, 0.17677669
        %v1034 = vmul.f32 %v883, 0.17677669
        %v1035 = vmul.f32 %v887, 0.17677669
        %v1036 = vmul.f32 %v893, 0.17677669
        %v1037 = vmul.f32 %v897, 0.17677669
        %v1038 = vmul.f32 %v903, 0.17677669
        %v1039 = vmul.f32 %v907, 0.17677669
        %v1040 = vmul.f32 %v913, 0.17677669
        %v1041 = vmul.f32 %v917, 0.17677669
        %v1042 = vmul.f32 %v923, 0.17677669
        %v1043 = vmul.f32 %v927, 0.17677669
        %v1044 = vpack.c.bf16 %v1029, %v1028
        %v1045 = vpack.c.bf16 %v1031, %v1030
        %v1046 = vpack.c.bf16 %v1033, %v1032
        %v1047 = vpack.c.bf16 %v1035, %v1034
        %v1048 = vpack.c.bf16 %v1037, %v1036
        %v1049 = vpack.c.bf16 %v1039, %v1038
        %v1050 = vpack.c.bf16 %v1041, %v1040
        %v1051 = vpack.c.bf16 %v1043, %v1042
        %v1060 = vunpack.c.l.b16 %v1044
        %v1061 = vunpack.c.h.b16 %v1044
        %v1062 = vunpack.c.l.b16 %v1045
        %v1063 = vunpack.c.h.b16 %v1045
        %v1064 = vunpack.c.l.b16 %v1046
        %v1065 = vunpack.c.h.b16 %v1046
        %v1066 = vunpack.c.l.b16 %v1047
        %v1067 = vunpack.c.h.b16 %v1047
        %v1068 = vunpack.c.l.b16 %v1048
        %v1069 = vunpack.c.h.b16 %v1048
        %v1070 = vunpack.c.l.b16 %v1049
        %v1071 = vunpack.c.h.b16 %v1049
        %v1072 = vunpack.c.l.b16 %v1050
        %v1073 = vunpack.c.h.b16 %v1050
        %v1074 = vunpack.c.l.b16 %v1051
        %v1075 = vunpack.c.h.b16 %v1051
        %v1076 = vpack.c.b16 %v1060, %v1060
        %v1077 = vpack.c.b16 %v1061, %v1061
        %v1078 = vpack.c.b16 %v1062, %v1062
        %v1079 = vpack.c.b16 %v1063, %v1063
        %v1080 = vpack.c.b16 %v1064, %v1064
        %v1081 = vpack.c.b16 %v1065, %v1065
        %v1082 = vpack.c.b16 %v1066, %v1066
        %v1083 = vpack.c.b16 %v1067, %v1067
        %v1084 = vpack.c.b16 %v1068, %v1068
        %v1085 = vpack.c.b16 %v1069, %v1069
        %v1086 = vpack.c.b16 %v1070, %v1070
        %v1087 = vpack.c.b16 %v1071, %v1071
        %v1088 = vpack.c.b16 %v1072, %v1072
        %v1089 = vpack.c.b16 %v1073, %v1073
        %v1090 = vpack.c.b16 %v1074, %v1074
        %v1091 = vpack.c.b16 %v1075, %v1075
        %1108 = vst [vmem:[%s374] sm:$0xf] %v1076
        %1109 = vst [vmem:[%s374 + $0x4] sm:$0xf] %v1077
        %1110 = vst [vmem:[%s374 + $0x8] sm:$0xf] %v1078
        %1111 = vst [vmem:[%s374 + $0xc] sm:$0xf] %v1079
        %1112 = vst [vmem:[%s374 + $0x10] sm:$0xf] %v1080
        %1113 = vst [vmem:[%s374 + $0x14] sm:$0xf] %v1081
        %1114 = vst [vmem:[%s374 + $0x18] sm:$0xf] %v1082
        %1115 = vst [vmem:[%s374 + $0x1c] sm:$0xf] %v1083
        %1116 = vst [vmem:[%s374 + $0x20] sm:$0xf] %v1084
        %1117 = vst [vmem:[%s374 + $0x24] sm:$0xf] %v1085
        %1118 = vst [vmem:[%s374 + $0x28] sm:$0xf] %v1086
        %1119 = vst [vmem:[%s374 + $0x2c] sm:$0xf] %v1087
        %1120 = vst [vmem:[%s374 + $0x30] sm:$0xf] %v1088
        %1121 = vst [vmem:[%s374 + $0x34] sm:$0xf] %v1089
        %1122 = vst [vmem:[%s374 + $0x38] sm:$0xf] %v1090
        %1123 = vst [vmem:[%s374 + $0x3c] sm:$0xf] %v1091
        %v1124 = vpack.c.bf16 %v859, %v855
        %v1125 = vpack.c.bf16 %v869, %v865
        %v1126 = vpack.c.bf16 %v879, %v875
        %v1127 = vpack.c.bf16 %v889, %v885
        %v1128 = vpack.c.bf16 %v899, %v895
        %v1129 = vpack.c.bf16 %v909, %v905
        %v1130 = vpack.c.bf16 %v919, %v915
        %v1131 = vpack.c.bf16 %v929, %v925
        %v1140 = vunpack.c.l.b16 %v1124
        %v1141 = vunpack.c.h.b16 %v1124
        %v1142 = vunpack.c.l.b16 %v1125
        %v1143 = vunpack.c.h.b16 %v1125
        %v1144 = vunpack.c.l.b16 %v1126
        %v1145 = vunpack.c.h.b16 %v1126
        %v1146 = vunpack.c.l.b16 %v1127
        %v1147 = vunpack.c.h.b16 %v1127
        %v1148 = vunpack.c.l.b16 %v1128
        %v1149 = vunpack.c.h.b16 %v1128
        %v1150 = vunpack.c.l.b16 %v1129
        %v1151 = vunpack.c.h.b16 %v1129
        %v1152 = vunpack.c.l.b16 %v1130
        %v1153 = vunpack.c.h.b16 %v1130
        %v1154 = vunpack.c.l.b16 %v1131
        %v1155 = vunpack.c.h.b16 %v1131
        %v1156 = vpack.c.b16 %v1140, %v1140
        %v1157 = vpack.c.b16 %v1141, %v1141
        %v1158 = vpack.c.b16 %v1142, %v1142
        %v1159 = vpack.c.b16 %v1143, %v1143
        %v1160 = vpack.c.b16 %v1144, %v1144
        %v1161 = vpack.c.b16 %v1145, %v1145
        %v1162 = vpack.c.b16 %v1146, %v1146
        %v1163 = vpack.c.b16 %v1147, %v1147
        %v1164 = vpack.c.b16 %v1148, %v1148
        %v1165 = vpack.c.b16 %v1149, %v1149
        %v1166 = vpack.c.b16 %v1150, %v1150
        %v1167 = vpack.c.b16 %v1151, %v1151
        %v1168 = vpack.c.b16 %v1152, %v1152
        %v1169 = vpack.c.b16 %v1153, %v1153
        %v1170 = vpack.c.b16 %v1154, %v1154
        %v1171 = vpack.c.b16 %v1155, %v1155
        %1188 = vst [vmem:[%s381] sm:$0xf] %v1156
        %1189 = vst [vmem:[%s381 + $0x4] sm:$0xf] %v1157
        %1190 = vst [vmem:[%s381 + $0x8] sm:$0xf] %v1158
        %1191 = vst [vmem:[%s381 + $0xc] sm:$0xf] %v1159
        %1192 = vst [vmem:[%s381 + $0x10] sm:$0xf] %v1160
        %1193 = vst [vmem:[%s381 + $0x14] sm:$0xf] %v1161
        %1194 = vst [vmem:[%s381 + $0x18] sm:$0xf] %v1162
        %1195 = vst [vmem:[%s381 + $0x1c] sm:$0xf] %v1163
        %1196 = vst [vmem:[%s381 + $0x20] sm:$0xf] %v1164
        %1197 = vst [vmem:[%s381 + $0x24] sm:$0xf] %v1165
        %1198 = vst [vmem:[%s381 + $0x28] sm:$0xf] %v1166
        %1199 = vst [vmem:[%s381 + $0x2c] sm:$0xf] %v1167
        %1200 = vst [vmem:[%s381 + $0x30] sm:$0xf] %v1168
        %1201 = vst [vmem:[%s381 + $0x34] sm:$0xf] %v1169
        %1202 = vst [vmem:[%s381 + $0x38] sm:$0xf] %v1170
        %1203 = vst [vmem:[%s381 + $0x3c] sm:$0xf] %v1171
        %v1204 = vpack.c.bf16 %v969, %v966
        %v1205 = vpack.c.bf16 %v977, %v974
        %v1206 = vpack.c.bf16 %v985, %v982
        %v1207 = vpack.c.bf16 %v993, %v990
        %v1208 = vpack.c.bf16 %v1001, %v998
        %v1209 = vpack.c.bf16 %v1009, %v1006
        %v1210 = vpack.c.bf16 %v1017, %v1014
        %v1211 = vpack.c.bf16 %v1025, %v1022
        %v1220 = vunpack.c.l.b16 %v1204
        %v1221 = vunpack.c.h.b16 %v1204
        %v1222 = vunpack.c.l.b16 %v1205
        %v1223 = vunpack.c.h.b16 %v1205
        %v1224 = vunpack.c.l.b16 %v1206
        %v1225 = vunpack.c.h.b16 %v1206
        %v1226 = vunpack.c.l.b16 %v1207
        %v1227 = vunpack.c.h.b16 %v1207
        %v1228 = vunpack.c.l.b16 %v1208
        %v1229 = vunpack.c.h.b16 %v1208
        %v1230 = vunpack.c.l.b16 %v1209
        %v1231 = vunpack.c.h.b16 %v1209
        %v1232 = vunpack.c.l.b16 %v1210
        %v1233 = vunpack.c.h.b16 %v1210
        %v1234 = vunpack.c.l.b16 %v1211
        %v1235 = vunpack.c.h.b16 %v1211
        %v1236 = vpack.c.b16 %v1220, %v1220
        %v1237 = vpack.c.b16 %v1221, %v1221
        %v1238 = vpack.c.b16 %v1222, %v1222
        %v1239 = vpack.c.b16 %v1223, %v1223
        %v1240 = vpack.c.b16 %v1224, %v1224
        %v1241 = vpack.c.b16 %v1225, %v1225
        %v1242 = vpack.c.b16 %v1226, %v1226
        %v1243 = vpack.c.b16 %v1227, %v1227
        %v1244 = vpack.c.b16 %v1228, %v1228
        %v1245 = vpack.c.b16 %v1229, %v1229
        %v1246 = vpack.c.b16 %v1230, %v1230
        %v1247 = vpack.c.b16 %v1231, %v1231
        %v1248 = vpack.c.b16 %v1232, %v1232
        %v1249 = vpack.c.b16 %v1233, %v1233
        %v1250 = vpack.c.b16 %v1234, %v1234
        %v1251 = vpack.c.b16 %v1235, %v1235
        %1268 = vst [vmem:[%s388] sm:$0xf] %v1236
        %1269 = vst [vmem:[%s388 + $0x4] sm:$0xf] %v1237
        %1270 = vst [vmem:[%s388 + $0x8] sm:$0xf] %v1238
        %1271 = vst [vmem:[%s388 + $0xc] sm:$0xf] %v1239
        %1272 = vst [vmem:[%s388 + $0x10] sm:$0xf] %v1240
        %1273 = vst [vmem:[%s388 + $0x14] sm:$0xf] %v1241
        %1274 = vst [vmem:[%s388 + $0x18] sm:$0xf] %v1242
        %1275 = vst [vmem:[%s388 + $0x1c] sm:$0xf] %v1243
        %1276 = vst [vmem:[%s388 + $0x20] sm:$0xf] %v1244
        %1277 = vst [vmem:[%s388 + $0x24] sm:$0xf] %v1245
        %1278 = vst [vmem:[%s388 + $0x28] sm:$0xf] %v1246
        %1279 = vst [vmem:[%s388 + $0x2c] sm:$0xf] %v1247
        %1280 = vst [vmem:[%s388 + $0x30] sm:$0xf] %v1248
        %1281 = vst [vmem:[%s388 + $0x34] sm:$0xf] %v1249
        %1282 = vst [vmem:[%s388 + $0x38] sm:$0xf] %v1250
        %1283 = vst [vmem:[%s388 + $0x3c] sm:$0xf] %v1251
        %s1284 = sand.u32 %s164, 1
        %s1285 = scalar_lea.sflag [#allocation4], %s1284
        %s1286 = sand.u32 %s164, 1
        %s1287 = smul.addr %s1286, 64
        %s1288 = scalar_lea.vmem [#allocation11], %s1287
        %s1289 = sand.u32 %s30, 1
        %s1290 = scalar_lea.sflag [#allocation13], %s1289
        %s1291 = sand.u32 %s192, 1
        %s1292 = smul.addr %s1291, 64
        %s1293 = scalar_lea.vmem [#allocation12], %s1292
        %s1294 = sand.u32 %s30, 1
        %s1295 = scalar_lea.sflag [#allocation13], %s1294
        %s1296 = sand.u32 %s220, 1
        %s1297 = smul.addr %s1296, 64
        %s1298 = scalar_lea.vmem [#allocation14], %s1297
        // Predicated region
        $region61: #{tpu_custom_call.1} parent=39 // pred_check
          %p1299 = pneg %p174
        $region62: #{tpu_custom_call.1} parent=39 // pred_check_branch
          %1301 = sbr.rel (%p1299) target = $region64
        $region63: #{tpu_custom_call.1} parent=39 // pred_region
          %s1302 = smul.u32 16, %s35
          %s1304 = ssub.s32 1024, 1024
          %1305 = vsyncadd %s1285, %s1304
          %s1306 = smul.addr %s34, 16
          %s1307 = sadd.s32 %s1302, %s1306
          %s1308 = smul.addr %s1307, 64
          %s1309 = scalar_lea.hbm %s5, %s1308
          %s1310 = sshll.u32 %s1288, 4
          %s1311 = int_to_ptr.vmem [resolvable:$true] %s1310
          %1316 = dma.vmem_to_hbm [thread:$0]  %s1311, 1024, %s1309, %s1285, 64, 64, 4
        $region64: #{tpu_custom_call.1} parent=39 // pred_fallthru
          _
        // Predicated region
        $region65: #{tpu_custom_call.1} parent=39 // pred_check
          %p1317 = pneg %p202
        $region66: #{tpu_custom_call.1} parent=39 // pred_check_branch
          %1319 = sbr.rel (%p1317) target = $region68
        $region67: #{tpu_custom_call.1} parent=39 // pred_region
          %s1320 = smul.u32 16, %s35
          %s1322 = ssub.s32 1024, 1024
          %1323 = vsyncadd %s1290, %s1322
          %s1324 = smul.addr %s34, 16
          %s1325 = sadd.s32 %s1320, %s1324
          %s1326 = smul.addr %s1325, 64
          %s1327 = scalar_lea.hbm %s6, %s1326
          %s1328 = sshll.u32 %s1293, 4
          %s1329 = int_to_ptr.vmem [resolvable:$true] %s1328
          %1334 = dma.vmem_to_hbm [thread:$0]  %s1329, 1024, %s1327, %s1290, 64, 64, 4
        $region68: #{tpu_custom_call.1} parent=39 // pred_fallthru
          _
        // Predicated region
        $region69: #{tpu_custom_call.1} parent=39 // pred_check
          %p1335 = pneg %p230
        $region70: #{tpu_custom_call.1} parent=39 // pred_check_branch
          %1337 = sbr.rel (%p1335) target = $region72
        $region71: #{tpu_custom_call.1} parent=39 // pred_region
          %s1338 = smul.u32 16, %s35
          %s1340 = ssub.s32 1024, 1024
          %1341 = vsyncadd %s1295, %s1340
          %s1342 = smul.addr %s34, 16
          %s1343 = sadd.s32 %s1338, %s1342
          %s1344 = smul.addr %s1343, 64
          %s1345 = scalar_lea.hbm %s7, %s1344
          %s1346 = sshll.u32 %s1298, 4
          %s1347 = int_to_ptr.vmem [resolvable:$true] %s1346
          %1352 = dma.vmem_to_hbm [thread:$0]  %s1347, 1024, %s1345, %s1295, 64, 64, 4
        $region72: #{tpu_custom_call.1} parent=39 // pred_fallthru
          _
      $region40: #{tpu_custom_call.1} parent=5 // pred_fallthru
        _
      %p1353 = scmp.le.s32.totalorder 2, %s25
      // Predicated region
      $region73: #{tpu_custom_call.1} parent=5 // pred_check
        %p1354 = pneg %p1353
      $region74: #{tpu_custom_call.1} parent=5 // pred_check_branch
        %1356 = sbr.rel (%p1354) target = $region76
      $region75: #{tpu_custom_call.1} parent=5 // pred_region
        %s1357 = ssub.s32 %s25, 2
        // Predicated region
        $region77: #{tpu_custom_call.1} parent=75 // pred_check
          %p1358 = pneg %p180
        $region78: #{tpu_custom_call.1} parent=75 // pred_check_branch
          %1360 = sbr.rel (%p1358) target = $region80
        $region79: #{tpu_custom_call.1} parent=75 // pred_region
          %s1361 = sand.u32 %s165, 1
          %s1362 = scalar_lea.sflag [#allocation4], %s1361
          %s1363 = sand.u32 %s165, 1
          %s1364 = smul.addr %s1363, 64
          %s1365 = scalar_lea.vmem [#allocation11], %s1364
          %1366 = dma.done %s1362, 1024
        $region80: #{tpu_custom_call.1} parent=75 // pred_fallthru
          _
        // Predicated region
        $region81: #{tpu_custom_call.1} parent=75 // pred_check
          %p1367 = pneg %p208
        $region82: #{tpu_custom_call.1} parent=75 // pred_check_branch
          %1369 = sbr.rel (%p1367) target = $region84
        $region83: #{tpu_custom_call.1} parent=75 // pred_region
          %s1370 = sand.u32 %s31, 1
          %s1371 = scalar_lea.sflag [#allocation13], %s1370
          %s1372 = sand.u32 %s193, 1
          %s1373 = smul.addr %s1372, 64
          %s1374 = scalar_lea.vmem [#allocation12], %s1373
          %1375 = dma.done %s1371, 1024
        $region84: #{tpu_custom_call.1} parent=75 // pred_fallthru
          _
        // Predicated region
        $region85: #{tpu_custom_call.1} parent=75 // pred_check
          %p1376 = pneg %p236
        $region86: #{tpu_custom_call.1} parent=75 // pred_check_branch
          %1378 = sbr.rel (%p1376) target = $region88
        $region87: #{tpu_custom_call.1} parent=75 // pred_region
          %s1379 = sand.u32 %s31, 1
          %s1380 = scalar_lea.sflag [#allocation13], %s1379
          %s1381 = sand.u32 %s221, 1
          %s1382 = smul.addr %s1381, 64
          %s1383 = scalar_lea.vmem [#allocation14], %s1382
          %1384 = dma.done %s1380, 1024
        $region88: #{tpu_custom_call.1} parent=75 // pred_fallthru
          _
      $region76: #{tpu_custom_call.1} parent=5 // pred_fallthru
        _
    $region6: #{tpu_custom_call.1} parent=1 // loop_footer
      %s29 = sadd.s32 1, %s25
    $region7: #{tpu_custom_call.1} parent=1 // loop_footer_branch
      %24 = sbr.rel target = $region3
    $region8: #{tpu_custom_call.1} parent=1 // loop_exit
      _
    %1385 = vsyncpa [#allocation3], 1
    %s1386 = scalar_lea.sflag [#allocation3], 1
    %1387 = vsyncpa %s1386, 1
    %1388 = vsyncpa [#allocation6], 1
    %1389 = vsyncpa [#allocation9], 1
    %1390 = vsyncpa [#allocation4], 1
    %s1391 = scalar_lea.sflag [#allocation4], 1
    %1392 = vsyncpa %s1391, 1
    %1393 = vsyncpa [#allocation13], 1
    %s1394 = scalar_lea.sflag [#allocation13], 1
    %1395 = vsyncpa %s1394, 1

</llo_original>
